<compile_context>
chip_gen: v6e
topology: v6e:2x2x1
jax: 0.10.0
libtpu: 0.0.40
codegen_flags: <defaults>
</compile_context>

<pallas_src>
import functools

import jax
import jax.numpy as jnp
from jax.experimental import pallas as pl
from jax.experimental.pallas import tpu as pltpu

EPS = 1e-5
_VMEM_LIMIT = 48 * 1024 * 1024          # scoped VMEM budget (safe on v5e/v6e/v7x)
_VMEM_BLOCK_BUDGET = 4 * 1024 * 1024    # per (TN,3,K) block, measured post-padding


def _round_up(x, m):
    return ((x + m - 1) // m) * m


def _pick_tile_n(n, k):
    """Node-tile size: as large as the double-buffered VMEM budget allows."""
    k_pad = _round_up(max(k, 1), 128)
    row_bytes = 8 * k_pad * 4            # one node's (3,K) slab after (8,128) padding, f32-worst-case
    tn = max(8, (_VMEM_BLOCK_BUDGET // row_bytes) // 8 * 8)
    return max(1, min(tn, n))


# ---------------------------------------------------------------------------
# Kernels — blocks keep the module's native [TN, 3, K] layout
# ---------------------------------------------------------------------------

def _node_kernel(w_ref, v_ref, o_ref, *, eps):
    """out = v * weight / (||v||_2 + eps), per node."""
    v = v_ref[...].astype(jnp.float32)                       # [TN, 3, K]
    v0, v1, v2 = v[:, 0, :], v[:, 1, :], v[:, 2, :]
    norm = jnp.sqrt(v0 * v0 + v1 * v1 + v2 * v2)              # [TN, K]
    scale = w_ref[...] / (norm + eps)                         # [1,K]/[TN,K] -> [TN,K], exact
    o_ref[...] = (v * scale[:, None, :]).astype(o_ref.dtype)  # single cast at the end


def _graph_kernel(w_ref, v_ref, o_ref, sum_ref, scale_ref, *, n_total, inv_n, eps):
    """Fused two-phase graph mode: phase 0 sums ||v|| over all nodes into a
    resident [1,K] scratch; phase 1 scales and writes the output."""
    phase = pl.program_id(0)
    i = pl.program_id(1)
    tn = v_ref.shape[0]

    @pl.when(jnp.logical_and(phase == 0, i == 0))
    def _init():
        sum_ref[...] = jnp.zeros_like(sum_ref)

    @pl.when(phase == 0)
    def _accumulate():
        v = v_ref[...].astype(jnp.float32)                    # [TN, 3, K]
        v0, v1, v2 = v[:, 0, :], v[:, 1, :], v[:, 2, :]
        norm = jnp.sqrt(v0 * v0 + v1 * v1 + v2 * v2)          # [TN, K]
        # Mask the ragged tail of the last block (garbage rows beyond N).
        row = jax.lax.broadcasted_iota(jnp.int32, norm.shape, 0) + i * tn
        norm = jnp.where(row < n_total, norm, 0.0)
        sum_ref[...] += jnp.sum(norm, axis=0, keepdims=True)  # [1, K]

    @pl.when(jnp.logical_and(phase == 1, i == 0))
    def _finalize_scale():
        scale_ref[...] = w_ref[...] / (sum_ref[...] * inv_n + eps)

    @pl.when(phase == 1)
    def _scale():
        v = v_ref[...].astype(jnp.float32)                    # [TN, 3, K]
        s = scale_ref[...][:, None, :]                        # [1, 1, K]
        o_ref[...] = (v * s).astype(o_ref.dtype)


# ---------------------------------------------------------------------------
# Wrapper mirroring VectorLayerNorm.forward(v, batch=None, batch_size=None)
# ---------------------------------------------------------------------------

def vector_layer_norm(v, weight=None, *, eps=EPS, affine=True, mode="graph",
                      batch=None, batch_size=None, block_n=None):
    N, three, K = v.shape
    assert three == 3, "expected vector features of shape [n, 3, k]"
    if not affine or weight is None:
        weight = jnp.ones((K,), jnp.float32)              # reset_parameters(): ones
    w_row = jnp.asarray(weight, jnp.float32).reshape(1, K)

    if mode not in ("graph", "node"):
        raise ValueError(f"Unknown normalization mode: {mode}")

    if mode == "graph" and batch is not None:
        # TODO(synk): scatter-mean over a batch vector stays in plain JAX (no Pallas scatter).
        if batch_size is None:
            batch_size = int(jnp.max(batch)) + 1
        vf = v.astype(jnp.float32)
        norm = jnp.sqrt(jnp.sum(vf * vf, axis=1))                               # [N, K]
        sums = jax.ops.segment_sum(norm, batch, num_segments=batch_size)        # [B, K]
        cnts = jax.ops.segment_sum(jnp.ones((N,), jnp.float32), batch,
                                   num_segments=batch_size)                     # [B]
        mean = sums / jnp.maximum(cnts, 1.0)[:, None]
        scale = (w_row[0] / (mean + eps))[batch]                                # [N, K]
        return (vf * scale[:, None, :]).astype(v.dtype)

    tn = block_n if block_n is not None else _pick_tile_n(N, K)
    tn = max(1, min(int(tn), N))
    n_tiles = pl.cdiv(N, tn)

    w_spec_node = pl.BlockSpec((1, K), lambda i: (0, 0))
    v_spec_node = pl.BlockSpec((tn, 3, K), lambda i: (i, 0, 0))

    if mode == "node":
        return pl.pallas_call(
            functools.partial(_node_kernel, eps=float(eps)),
            out_shape=jax.ShapeDtypeStruct((N, 3, K), v.dtype),
            grid_spec=pl.GridSpec(
                grid=(n_tiles,),
                in_specs=[w_spec_node, v_spec_node],
                out_specs=v_spec_node),
            compiler_params=pltpu.CompilerParams(
                dimension_semantics=("parallel",),
                vmem_limit_bytes=_VMEM_LIMIT),
        )(w_row, v)

    # mode == "graph", batch is None: single fused two-phase kernel.
    w_spec = pl.BlockSpec((1, K), lambda p, i: (0, 0))
    v_spec = pl.BlockSpec((tn, 3, K), lambda p, i: (i, 0, 0))
    # During phase 0 the output block index stays at 0 (resident, never written
    # back); phase 1 walks the blocks and writes each exactly once.
    o_spec = pl.BlockSpec((tn, 3, K), lambda p, i: (i * p, 0, 0))

    return pl.pallas_call(
        functools.partial(_graph_kernel, n_total=N, inv_n=1.0 / N, eps=float(eps)),
        out_shape=jax.ShapeDtypeStruct((N, 3, K), v.dtype),
        grid_spec=pl.GridSpec(
            grid=(2, n_tiles),
            in_specs=[w_spec, v_spec],
            out_specs=o_spec,
            scratch_shapes=[pltpu.VMEM((1, K), jnp.float32),   # running sum of norms
                            pltpu.VMEM((1, K), jnp.float32)],  # folded scale
        ),
        compiler_params=pltpu.CompilerParams(
            dimension_semantics=("arbitrary", "arbitrary"),
            vmem_limit_bytes=_VMEM_LIMIT),
    )(w_row, v)


# ---------------------------------------------------------------------------
# Reference + self-test
# ---------------------------------------------------------------------------

def _reference(v, weight, eps, mode):
    norm = jnp.sqrt(jnp.sum(v * v, axis=1))                   # [N, K]
    if mode == "graph":
        mean = jnp.mean(norm, axis=0)                         # [K]
        out = v / (mean + eps)[None, None, :]
    else:  # node
        out = v / (norm + eps)[:, None, :]
    return out * weight


if __name__ == "__main__":
    key = jax.random.PRNGKey(0)
    N, K = 300, 32                                            # n nodes, k channels
    kv, _ = jax.random.split(key)
    v = jax.random.normal(kv, (N, 3, K), dtype=jnp.float32)
    weight = jnp.linspace(0.5, 1.5, K, dtype=jnp.float32)

    ref_graph = _reference(v, weight, EPS, "graph")
    ref_node = _reference(v, weight, EPS, "node")

    # graph mode, multi-tile grid with a ragged tail (exercises in-kernel mask).
    out_graph = jax.block_until_ready(
        vector_layer_norm(v, weight, eps=EPS, mode="graph", block_n=64))
    assert out_graph.shape == (N, 3, K)
    assert jnp.allclose(out_graph, ref_graph, atol=1e-5, rtol=1e-4), (
        float(jnp.max(jnp.abs(out_graph - ref_graph))))

    # graph mode, auto tile size (single resident block for this small N).
    out_graph2 = jax.block_until_ready(
        vector_layer_norm(v, weight, eps=EPS, mode="graph"))
    assert jnp.allclose(out_graph2, ref_graph, atol=1e-5, rtol=1e-4)

    # node mode (exact reciprocal is the default) — tight tolerance.
    out_node = jax.block_until_ready(
        vector_layer_norm(v, weight, eps=EPS, mode="node", block_n=64))
    assert jnp.allclose(out_node, ref_node, atol=1e-5, rtol=1e-4), (
        float(jnp.max(jnp.abs(out_node - ref_node))))

    # bf16 input: math is done in f32 in-kernel, one final cast to bf16.
    v_bf = v.astype(jnp.bfloat16)
    out_bf = jax.block_until_ready(
        vector_layer_norm(v_bf, weight, eps=EPS, mode="graph", block_n=64))
    assert out_bf.dtype == jnp.bfloat16
    ref_bf = _reference(v_bf.astype(jnp.float32), weight, EPS, "graph")
    assert jnp.allclose(out_bf.astype(jnp.float32), ref_bf, atol=1e-2, rtol=2e-2)

    # graph mode with a batch vector (pure-JAX scatter-mean fallback).
    batch = jnp.concatenate([jnp.zeros((120,), jnp.int32), jnp.ones((180,), jnp.int32)])
    out_b = jax.block_until_ready(
        vector_layer_norm(v, weight, eps=EPS, mode="graph", batch=batch, batch_size=2))
    norm_all = jnp.sqrt(jnp.sum(v * v, axis=1))
    m0, m1 = norm_all[:120].mean(0), norm_all[120:].mean(0)
    ref_b = jnp.concatenate(
        [v[:120] / (m0 + EPS)[None, None, :], v[120:] / (m1 + EPS)[None, None, :]],
        axis=0) * weight
    assert jnp.allclose(out_b, ref_b, atol=1e-5, rtol=1e-4)

    print("KERNEL_OK")
</pallas_src>

<mosaic_0001>
module attributes {stable_mosaic.version = 11 : i64} {
  func.func @_graph_kernel(%arg0: i32, %arg1: i32, %arg2: memref<1x32xf32, #tpu.memory_space<vmem>>, %arg3: memref<64x3x32xf32, #tpu.memory_space<vmem>>, %arg4: memref<64x3x32xf32, #tpu.memory_space<vmem>>, %arg5: memref<1x32xf32, #tpu.memory_space<vmem>>, %arg6: memref<1x32xf32, #tpu.memory_space<vmem>>) attributes {dimension_semantics = [#tpu.dimension_semantics<arbitrary>, #tpu.dimension_semantics<arbitrary>], iteration_bounds = array<i64: 2, 5>, scalar_prefetch = 0 : i64, scratch_operands = 2 : i64, tpu.core_type = #tpu.core_type<tc>, window_params = [{pipeline_mode = #tpu.pipeline_mode<synchronous>, transform_indices = @transform_0, window_bounds = array<i64: 1, 32>}, {transform_indices = @transform_1, window_bounds = array<i64: 64, 3, 32>}, {transform_indices = @transform_2, window_bounds = array<i64: 64, 3, 32>}]} {
    %c0_i32 = arith.constant 0 : i32
    %0 = arith.cmpi eq, %arg0, %c0_i32 : i32
    %c0_i32_0 = arith.constant 0 : i32
    %1 = arith.cmpi eq, %arg1, %c0_i32_0 : i32
    %2 = arith.andi %0, %1 : i1
    %3 = arith.extui %2 : i1 to i32
    %c0_i32_1 = arith.constant 0 : i32
    %4 = arith.cmpi ne, %3, %c0_i32_1 : i32
    scf.if %4 {
      %cst = arith.constant 0.000000e+00 : f32
      %16 = vector.broadcast %cst : f32 to vector<1x32xf32>
      %c0 = arith.constant 0 : index
      %c0_8 = arith.constant 0 : index
      %17 = vector.load %arg5[%c0, %c0_8] : memref<1x32xf32, #tpu.memory_space<vmem>>, vector<1x32xf32>
      tpu.vector_store %arg5[%c0, %c0_8], %16 {strides = array<i32>} : memref<1x32xf32, #tpu.memory_space<vmem>>, vector<1x32xf32>,
    } else {
    }
    %c0_i32_2 = arith.constant 0 : i32
    %5 = arith.cmpi eq, %arg0, %c0_i32_2 : i32
    %6 = arith.extui %5 : i1 to i32
    %c0_i32_3 = arith.constant 0 : i32
    %7 = arith.cmpi ne, %6, %c0_i32_3 : i32
    scf.if %7 {
      %c0 = arith.constant 0 : index
      %c0_8 = arith.constant 0 : index
      %c0_9 = arith.constant 0 : index
      %16 = vector.load %arg3[%c0, %c0_8, %c0_9] : memref<64x3x32xf32, #tpu.memory_space<vmem>>, vector<64x3x32xf32>
      %17 = vector.extract_strided_slice %16 {offsets = [0, 0, 0], sizes = [64, 1, 32], strides = [1, 1, 1]} : vector<64x3x32xf32> to vector<64x1x32xf32>
      %18 = vector.shape_cast %17 : vector<64x1x32xf32> to vector<64x32xf32>
      %19 = vector.extract_strided_slice %16 {offsets = [0, 1, 0], sizes = [64, 1, 32], strides = [1, 1, 1]} : vector<64x3x32xf32> to vector<64x1x32xf32>
      %20 = vector.shape_cast %19 : vector<64x1x32xf32> to vector<64x32xf32>
      %21 = vector.extract_strided_slice %16 {offsets = [0, 2, 0], sizes = [64, 1, 32], strides = [1, 1, 1]} : vector<64x3x32xf32> to vector<64x1x32xf32>
      %22 = vector.shape_cast %21 : vector<64x1x32xf32> to vector<64x32xf32>
      %23 = arith.mulf %18, %18 : vector<64x32xf32>
      %24 = arith.mulf %20, %20 : vector<64x32xf32>
      %25 = arith.addf %23, %24 : vector<64x32xf32>
      %26 = arith.mulf %22, %22 : vector<64x32xf32>
      %27 = arith.addf %25, %26 : vector<64x32xf32>
      %28 = math.sqrt %27 : vector<64x32xf32>
      %29 = tpu.iota {dimensions = array<i32: 0>} : vector<64x32xi32>
      %c64_i32 = arith.constant 64 : i32
      %30 = arith.muli %arg1, %c64_i32 : i32
      %31 = vector.broadcast %30 : i32 to vector<64x32xi32>
      %32 = arith.addi %29, %31 : vector<64x32xi32>
      %c300_i32 = arith.constant 300 : i32
      %33 = vector.broadcast %c300_i32 : i32 to vector<64x32xi32>
      %34 = arith.cmpi slt, %32, %33 : vector<64x32xi32>
      %cst = arith.constant 0.000000e+00 : f32
      %35 = vector.broadcast %cst : f32 to vector<64x32xf32>
      %36 = arith.select %34, %28, %35 : vector<64x32xi1>, vector<64x32xf32>
      %c0_10 = arith.constant 0 : index
      %c0_11 = arith.constant 0 : index
      %37 = vector.load %arg5[%c0_10, %c0_11] : memref<1x32xf32, #tpu.memory_space<vmem>>, vector<1x32xf32>
      %cst_12 = arith.constant dense<0.000000e+00> : vector<32xf32>
      %38 = vector.multi_reduction <add>, %36, %cst_12 [0] : vector<64x32xf32> to vector<32xf32>
      %39 = vector.shape_cast %38 : vector<32xf32> to vector<1x32xf32>
      %40 = arith.addf %37, %39 : vector<1x32xf32>
      %c0_13 = arith.constant 0 : index
      %c0_14 = arith.constant 0 : index
      %41 = vector.load %arg5[%c0_13, %c0_14] : memref<1x32xf32, #tpu.memory_space<vmem>>, vector<1x32xf32>
      tpu.vector_store %arg5[%c0_13, %c0_14], %40 {strides = array<i32>} : memref<1x32xf32, #tpu.memory_space<vmem>>, vector<1x32xf32>,
    } else {
    }
    %c1_i32 = arith.constant 1 : i32
    %8 = arith.cmpi eq, %arg0, %c1_i32 : i32
    %c0_i32_4 = arith.constant 0 : i32
    %9 = arith.cmpi eq, %arg1, %c0_i32_4 : i32
    %10 = arith.andi %8, %9 : i1
    %11 = arith.extui %10 : i1 to i32
    %c0_i32_5 = arith.constant 0 : i32
    %12 = arith.cmpi ne, %11, %c0_i32_5 : i32
    scf.if %12 {
      %c0 = arith.constant 0 : index
      %c0_8 = arith.constant 0 : index
      %16 = vector.load %arg2[%c0, %c0_8] : memref<1x32xf32, #tpu.memory_space<vmem>>, vector<1x32xf32>
      %c0_9 = arith.constant 0 : index
      %c0_10 = arith.constant 0 : index
      %17 = vector.load %arg5[%c0_9, %c0_10] : memref<1x32xf32, #tpu.memory_space<vmem>>, vector<1x32xf32>
      %cst = arith.constant 0.00333333341 : f32
      %18 = vector.broadcast %cst : f32 to vector<1x32xf32>
      %19 = arith.mulf %17, %18 : vector<1x32xf32>
      %cst_11 = arith.constant 9.99999974E-6 : f32
      %20 = vector.broadcast %cst_11 : f32 to vector<1x32xf32>
      %21 = arith.addf %19, %20 : vector<1x32xf32>
      %22 = arith.divf %16, %21 : vector<1x32xf32>
      %c0_12 = arith.constant 0 : index
      %c0_13 = arith.constant 0 : index
      %23 = vector.load %arg6[%c0_12, %c0_13] : memref<1x32xf32, #tpu.memory_space<vmem>>, vector<1x32xf32>
      tpu.vector_store %arg6[%c0_12, %c0_13], %22 {strides = array<i32>} : memref<1x32xf32, #tpu.memory_space<vmem>>, vector<1x32xf32>,
    } else {
    }
    %c1_i32_6 = arith.constant 1 : i32
    %13 = arith.cmpi eq, %arg0, %c1_i32_6 : i32
    %14 = arith.extui %13 : i1 to i32
    %c0_i32_7 = arith.constant 0 : i32
    %15 = arith.cmpi ne, %14, %c0_i32_7 : i32
    scf.if %15 {
      %c0 = arith.constant 0 : index
      %c0_8 = arith.constant 0 : index
      %c0_9 = arith.constant 0 : index
      %16 = vector.load %arg3[%c0, %c0_8, %c0_9] : memref<64x3x32xf32, #tpu.memory_space<vmem>>, vector<64x3x32xf32>
      %c0_10 = arith.constant 0 : index
      %c0_11 = arith.constant 0 : index
      %17 = vector.load %arg6[%c0_10, %c0_11] : memref<1x32xf32, #tpu.memory_space<vmem>>, vector<1x32xf32>
      %18 = vector.shape_cast %17 : vector<1x32xf32> to vector<1x1x32xf32>
      %19 = vector.broadcast %18 : vector<1x1x32xf32> to vector<64x3x32xf32>
      %20 = arith.mulf %16, %19 : vector<64x3x32xf32>
      %c0_12 = arith.constant 0 : index
      %c0_13 = arith.constant 0 : index
      %c0_14 = arith.constant 0 : index
      %21 = vector.load %arg4[%c0_12, %c0_13, %c0_14] : memref<64x3x32xf32, #tpu.memory_space<vmem>>, vector<64x3x32xf32>
      tpu.vector_store %arg4[%c0_12, %c0_13, %c0_14], %20 {strides = array<i32>} : memref<64x3x32xf32, #tpu.memory_space<vmem>>, vector<64x3x32xf32>,
    } else {
    }
    return
  }
  func.func @transform_0(%arg0: i32, %arg1: i32) -> (i32, i32) {
    %c0_i32 = arith.constant 0 : i32
    %c0_i32_0 = arith.constant 0 : i32
    %c0_i32_1 = arith.constant 0 : i32
    return %c0_i32, %c0_i32_0 : i32, i32
  }
  func.func @transform_1(%arg0: i32, %arg1: i32) -> (i32, i32, i32) {
    %c0_i32 = arith.constant 0 : i32
    %c0_i32_0 = arith.constant 0 : i32
    %c0_i32_1 = arith.constant 0 : i32
    return %arg1, %c0_i32, %c0_i32_0 : i32, i32, i32
  }
  func.func @transform_2(%arg0: i32, %arg1: i32) -> (i32, i32, i32) {
    %0 = arith.muli %arg1, %arg0 : i32
    %c0_i32 = arith.constant 0 : i32
    %c0_i32_0 = arith.constant 0 : i32
    %c0_i32_1 = arith.constant 0 : i32
    return %0, %c0_i32, %c0_i32_0 : i32, i32, i32
  }
}

</mosaic_0001>

<llo_original>
// kernel: tpu_custom_call.1
$region0: #{tpu_custom_call.1}
  #allocation0 [shape = 'u32[]', space=smem, size = 0x4, offset = 0x4, fixed_abs, tag = 'smem constant byte address 0x4 - core index']
  #allocation1 [shape = 'u32[144,128]{1,0:T(1,128)}', space=vmem, size = 0x12000, scoped, tag = 'internal scratch']
  #allocation2 [shape = 'f32[1,32]{1,0:T(1,128)}', space=vmem, size = 0x200, scoped, tag = 'scratch operand']
  #allocation3 [shape = 'f32[1,32]{1,0:T(1,128)}', space=vmem, size = 0x200, scoped, tag = 'scratch operand']
  %s0 = inlined_call_operand.vmem [shape: f32[1,32], index: 0, kind: input, shape index: {}]
  %s1 = inlined_call_operand.vmem [shape: f32[300,3,32], index: 1, kind: input, shape index: {}]
  %s2 = inlined_call_operand.vmem [shape: f32[300,3,32], index: 2, kind: output, shape index: {}]
  %s3 = sld [smem:[#allocation0]]
  $region101: #{tpu_custom_call.1} parent=0
    _
  %s5 = ssub.s32 1, %s3
  %s6 = scalar_select 0, %s5, %s3
  $region1: #{tpu_custom_call.1} parent=0
    #allocation4 [shape = 'u8[262144]{0}', space=vmem, size = 0x40000, scoped, tag = 'output window, operand 0']
    loop: start=0, step=1, limit=12
    $region2: #{tpu_custom_call.1} parent=1 // loop_pre_header
      _
    $region3: #{tpu_custom_call.1} parent=1 // loop_header
      %s8 = sphi 0, %s12
      %p9 = scmp.ge.s32.totalorder %s8, 12
      %s15 = sphi 0, %s27
      %s16 = sphi 0, %s23
      %s17 = sphi 0, %s15
      %s18 = sphi 0, %s16
      %s19 = sphi 0, %s17
      %s20 = sphi 0, %s18
      %s28 = sphi 0, %s28
      %s30 = sphi 0, %s28
      %s31 = sphi 0, %s30
      %s45 = sphi 0, %s31
      %s51 = sphi 0, %s53
      %s54 = sphi 0, %s51
      %s55 = sphi 0, %s54
      %s71 = sphi 0, %s55
      %s79 = sphi 0, %s81
      %s82 = sphi 0, %s79
      %s83 = sphi 0, %s82
      %s99 = sphi 0, %s83
    $region4: #{tpu_custom_call.1} parent=1 // loop_header_branch
      %11 = sbr.rel (%p9) target = $region8
    $region5: #{tpu_custom_call.1} parent=1 // loop_body
      %s13 = ssub.s32 %s8, 1
      %s14 = ssub.s32 %s8, 2
      %s21 = sadd.s32 1, %s16
      %p22 = scmp.ge.s32.totalorder %s21, 5
      %s23 = scalar_select %p22, 0, %s21
      %s24 = sadd.s32 1, %s15
      %s25 = scalar_select %p22, %s24, %s15
      %p26 = scmp.ge.s32.totalorder %s25, 2
      %s27 = scalar_select %p26, 0, %s25
      %s29 = sadd.s32 %s28, 1
      %p32 = scmp.eq.s32.totalorder %s8, 9
      %p33 = scmp.ne.s32.totalorder %s28, %s30
      %p34 = scmp.eq.s32.totalorder %s8, 0
      %p35 = por %p33, %p34
      %p36 = scmp.ne.s32.totalorder %s28, %s30
      %p37 = scmp.eq.s32.totalorder %s13, 9
      %p38 = por %p36, %p37
      %p39 = scmp.ne.s32.totalorder %s30, %s31
      %p40 = scmp.eq.s32.totalorder %s13, 0
      %p41 = por %p39, %p40
      %p42 = scmp.ne.s32.totalorder %s30, %s31
      %p43 = scmp.eq.s32.totalorder %s14, 9
      %p44 = por %p42, %p43
      %p46 = scmp.ne.s32.totalorder %s31, %s45
      %p47 = scmp.eq.s32.totalorder %s14, 0
      %p48 = por %p46, %p47
      %s49 = ssub.s32 %s16, %s23
      %p50 = scmp.eq.s32.totalorder %s49, 0
      %s52 = sadd.s32 %s51, 1
      %s53 = scalar_select %p50, %s51, %s52
      %p56 = pneg %p50
      %p57 = scmp.eq.s32.totalorder %s8, 9
      %p58 = por %p56, %p57
      %p59 = scmp.ne.s32.totalorder %s51, %s54
      %p60 = scmp.eq.s32.totalorder %s8, 0
      %p61 = por %p59, %p60
      %p62 = scmp.ne.s32.totalorder %s51, %s54
      %p63 = scmp.eq.s32.totalorder %s13, 9
      %p64 = por %p62, %p63
      %p65 = scmp.ne.s32.totalorder %s54, %s55
      %p66 = scmp.eq.s32.totalorder %s13, 0
      %p67 = por %p65, %p66
      %p68 = scmp.ne.s32.totalorder %s54, %s55
      %p69 = scmp.eq.s32.totalorder %s14, 9
      %p70 = por %p68, %p69
      %p72 = scmp.ne.s32.totalorder %s55, %s71
      %p73 = scmp.eq.s32.totalorder %s14, 0
      %p74 = por %p72, %p73
      %s75 = smul.u32 %s16, %s15
      %s76 = smul.u32 %s23, %s27
      %s77 = ssub.s32 %s75, %s76
      %p78 = scmp.eq.s32.totalorder %s77, 0
      %s80 = sadd.s32 %s79, 1
      %s81 = scalar_select %p78, %s79, %s80
      %p84 = pneg %p78
      %p85 = scmp.eq.s32.totalorder %s8, 9
      %p86 = por %p84, %p85
      %p87 = scmp.ne.s32.totalorder %s79, %s82
      %p88 = scmp.eq.s32.totalorder %s8, 0
      %p89 = por %p87, %p88
      %p90 = scmp.ne.s32.totalorder %s79, %s82
      %p91 = scmp.eq.s32.totalorder %s13, 9
      %p92 = por %p90, %p91
      %p93 = scmp.ne.s32.totalorder %s82, %s83
      %p94 = scmp.eq.s32.totalorder %s13, 0
      %p95 = por %p93, %p94
      %p96 = scmp.ne.s32.totalorder %s82, %s83
      %p97 = scmp.eq.s32.totalorder %s14, 9
      %p98 = por %p96, %p97
      %p100 = scmp.ne.s32.totalorder %s83, %s99
      %p101 = scmp.eq.s32.totalorder %s14, 0
      %p102 = por %p100, %p101
      %p103 = scmp.le.s32.totalorder 1, %s8
      %p104 = scmp.lt.s32.totalorder %s8, 11
      %p105 = pnand %p103, %p104
      %p106 = pneg %p105
      // Predicated region
      $region9: #{tpu_custom_call.1} parent=5 // pred_check
        _
      $region10: #{tpu_custom_call.1} parent=5 // pred_check_branch
        %108 = sbr.rel (%p105) target = $region12
      $region11: #{tpu_custom_call.1} parent=5 // pred_region
        %s109 = ssub.s32 %s8, 1
        // Predicated region
        $region13: #{tpu_custom_call.1} parent=11 // pred_check
          %p110 = pneg %p41
        $region14: #{tpu_custom_call.1} parent=11 // pred_check_branch
          %112 = sbr.rel (%p110) target = $region16
        $region15: #{tpu_custom_call.1} parent=11 // pred_region
          _
        $region16: #{tpu_custom_call.1} parent=11 // pred_fallthru
          _
      $region12: #{tpu_custom_call.1} parent=5 // pred_fallthru
        _
      %p113 = scmp.lt.s32.totalorder %s8, 10
      // Predicated region
      $region17: #{tpu_custom_call.1} parent=5 // pred_check
        %p114 = pneg %p113
      $region18: #{tpu_custom_call.1} parent=5 // pred_check_branch
        %116 = sbr.rel (%p114) target = $region20
      $region19: #{tpu_custom_call.1} parent=5 // pred_region
        // Predicated region
        $region21: #{tpu_custom_call.1} parent=19 // pred_check
          %p117 = pneg %p61
        $region22: #{tpu_custom_call.1} parent=19 // pred_check_branch
          %119 = sbr.rel (%p117) target = $region24
        $region23: #{tpu_custom_call.1} parent=19 // pred_region
          %s120 = smul.u32 64, %s16
          %s121 = ssub.s32 300, %s120
          %p122 = scmp.lt.s32.totalorder %s121, 64
          %s123 = scalar_select %p122, %s121, 64
          %s124 = smul.u32 64, %s123
          %p125 = scmp.lt.s32.totalorder %s120, 299
          %s126 = scalar_select %p125, %s120, 299
          %s127 = smul.addr %s126, 4
          %s128 = scalar_lea.vmem %s1, %s127
          %s129 = smul.u32 64, %s16
          %s130 = ssub.s32 300, %s129
          %p131 = scmp.lt.s32.totalorder %s130, 64
          %s132 = scalar_select %p131, %s130, 64
          %s133 = smul.u32 64, %s132
        $region24: #{tpu_custom_call.1} parent=19 // pred_fallthru
          _
      $region20: #{tpu_custom_call.1} parent=5 // pred_fallthru
        _
      %p134 = scmp.le.s32.totalorder 1, %s8
      %p135 = scmp.lt.s32.totalorder %s8, 11
      %p136 = pnand %p134, %p135
      %p137 = pneg %p136
      // Predicated region
      $region25: #{tpu_custom_call.1} parent=5 // pred_check
        _
      $region26: #{tpu_custom_call.1} parent=5 // pred_check_branch
        %139 = sbr.rel (%p136) target = $region28
      $region27: #{tpu_custom_call.1} parent=5 // pred_region
        %s140 = ssub.s32 %s8, 1
        %p141 = pneg %p41
        %p142 = pneg %p38
        %s143 = smul.u32 64, %s18
        %s144 = ssub.s32 300, %s143
        %p145 = scmp.lt.s32.totalorder %s144, 64
        %s146 = scalar_select %p145, %s144, 64
        %s147 = smul.u32 64, %s146
        %p148 = scmp.lt.s32.totalorder %s143, 299
        %s149 = scalar_select %p148, %s143, 299
        %s150 = smul.addr %s149, 4
        %s151 = scalar_lea.vmem %s1, %s150
        %p152 = pneg %p67
        %p153 = pneg %p64
        %p154 = pneg %p95
        %p155 = pneg %p92
        %s156 = sand.u32 %s82, 1
        %s157 = sand.u32 %s82, 1
        %s158 = smul.addr %s157, 256
        %s159 = scalar_lea.vmem [#allocation4], %s158
        %s160 = smul.u32 64, %s18
        %s161 = ssub.s32 300, %s160
        %p162 = scmp.lt.s32.totalorder %s161, 64
        %s163 = scalar_select %p162, %s161, 64
        %s164 = smul.u32 64, %s163
        %p165 = scmp.lt.s32.totalorder %s160, 299
        %s166 = scalar_select %p165, %s160, 299
        %s167 = smul.addr %s166, 4
        %s168 = scalar_lea.vmem %s1, %s167
        %s169 = smul.u32 64, %s18
        %s170 = ssub.s32 300, %s169
        %p171 = scmp.lt.s32.totalorder %s170, 64
        %s172 = scalar_select %p171, %s170, 64
        %s173 = smul.u32 64, %s172
        %s174 = smul.u32 %s18, %s17
        %s175 = smul.u32 64, %s174
        %s176 = ssub.s32 300, %s175
        %p177 = scmp.lt.s32.totalorder %s176, 64
        %s178 = scalar_select %p177, %s176, 64
        %s179 = smul.u32 64, %s178
        %p180 = scmp.eq.s32.totalorder %s17, 0
        %p181 = scmp.eq.s32.totalorder %s18, 0
        %p182 = pnand %p180, %p181
        %p183 = pneg %p182
        // Predicated region
        $region29: #{tpu_custom_call.1} parent=27 // pred_check
          _
        $region30: #{tpu_custom_call.1} parent=27 // pred_check_branch
          %185 = sbr.rel (%p182) target = $region32
        $region31: #{tpu_custom_call.1} parent=27 // pred_region
          %vm186 = vcmask 253952
          %187 = vst.msk [vmem:[#allocation2] sm:$0x1] %vm186, 0.0
        $region32: #{tpu_custom_call.1} parent=27 // pred_fallthru
          _
        // Predicated region
        $region33: #{tpu_custom_call.1} parent=27 // pred_check
          %p188 = pneg %p180
        $region34: #{tpu_custom_call.1} parent=27 // pred_check_branch
          %190 = sbr.rel (%p188) target = $region36
        $region35: #{tpu_custom_call.1} parent=27 // pred_region
          %v191 = vld [vmem:[%s168] sm:$0x7]
          %v192 = vld [vmem:[%s168 + $0x4] sm:$0x7]
          %v193 = vld [vmem:[%s168 + $0x8] sm:$0x7]
          %v194 = vld [vmem:[%s168 + $0xc] sm:$0x7]
          %v195 = vld [vmem:[%s168 + $0x10] sm:$0x7]
          %v196 = vld [vmem:[%s168 + $0x14] sm:$0x7]
          %v197 = vld [vmem:[%s168 + $0x18] sm:$0x7]
          %v198 = vld [vmem:[%s168 + $0x1c] sm:$0x7]
          %v199 = vld [vmem:[%s168 + $0x20] sm:$0x7]
          %v200 = vld [vmem:[%s168 + $0x24] sm:$0x7]
          %v201 = vld [vmem:[%s168 + $0x28] sm:$0x7]
          %v202 = vld [vmem:[%s168 + $0x2c] sm:$0x7]
          %v203 = vld [vmem:[%s168 + $0x30] sm:$0x7]
          %v204 = vld [vmem:[%s168 + $0x34] sm:$0x7]
          %v205 = vld [vmem:[%s168 + $0x38] sm:$0x7]
          %v206 = vld [vmem:[%s168 + $0x3c] sm:$0x7]
          %v207 = vld [vmem:[%s168 + $0x40] sm:$0x7]
          %v208 = vld [vmem:[%s168 + $0x44] sm:$0x7]
          %v209 = vld [vmem:[%s168 + $0x48] sm:$0x7]
          %v210 = vld [vmem:[%s168 + $0x4c] sm:$0x7]
          %v211 = vld [vmem:[%s168 + $0x50] sm:$0x7]
          %v212 = vld [vmem:[%s168 + $0x54] sm:$0x7]
          %v213 = vld [vmem:[%s168 + $0x58] sm:$0x7]
          %v214 = vld [vmem:[%s168 + $0x5c] sm:$0x7]
          %v215 = vld [vmem:[%s168 + $0x60] sm:$0x7]
          %v216 = vld [vmem:[%s168 + $0x64] sm:$0x7]
          %v217 = vld [vmem:[%s168 + $0x68] sm:$0x7]
          %v218 = vld [vmem:[%s168 + $0x6c] sm:$0x7]
          %v219 = vld [vmem:[%s168 + $0x70] sm:$0x7]
          %v220 = vld [vmem:[%s168 + $0x74] sm:$0x7]
          %v221 = vld [vmem:[%s168 + $0x78] sm:$0x7]
          %v222 = vld [vmem:[%s168 + $0x7c] sm:$0x7]
          %v223 = vld [vmem:[%s168 + $0x80] sm:$0x7]
          %v224 = vld [vmem:[%s168 + $0x84] sm:$0x7]
          %v225 = vld [vmem:[%s168 + $0x88] sm:$0x7]
          %v226 = vld [vmem:[%s168 + $0x8c] sm:$0x7]
          %v227 = vld [vmem:[%s168 + $0x90] sm:$0x7]
          %v228 = vld [vmem:[%s168 + $0x94] sm:$0x7]
          %v229 = vld [vmem:[%s168 + $0x98] sm:$0x7]
          %v230 = vld [vmem:[%s168 + $0x9c] sm:$0x7]
          %v231 = vld [vmem:[%s168 + $0xa0] sm:$0x7]
          %v232 = vld [vmem:[%s168 + $0xa4] sm:$0x7]
          %v233 = vld [vmem:[%s168 + $0xa8] sm:$0x7]
          %v234 = vld [vmem:[%s168 + $0xac] sm:$0x7]
          %v235 = vld [vmem:[%s168 + $0xb0] sm:$0x7]
          %v236 = vld [vmem:[%s168 + $0xb4] sm:$0x7]
          %v237 = vld [vmem:[%s168 + $0xb8] sm:$0x7]
          %v238 = vld [vmem:[%s168 + $0xbc] sm:$0x7]
          %v239 = vld [vmem:[%s168 + $0xc0] sm:$0x7]
          %v240 = vld [vmem:[%s168 + $0xc4] sm:$0x7]
          %v241 = vld [vmem:[%s168 + $0xc8] sm:$0x7]
          %v242 = vld [vmem:[%s168 + $0xcc] sm:$0x7]
          %v243 = vld [vmem:[%s168 + $0xd0] sm:$0x7]
          %v244 = vld [vmem:[%s168 + $0xd4] sm:$0x7]
          %v245 = vld [vmem:[%s168 + $0xd8] sm:$0x7]
          %v246 = vld [vmem:[%s168 + $0xdc] sm:$0x7]
          %v247 = vld [vmem:[%s168 + $0xe0] sm:$0x7]
          %v248 = vld [vmem:[%s168 + $0xe4] sm:$0x7]
          %v249 = vld [vmem:[%s168 + $0xe8] sm:$0x7]
          %v250 = vld [vmem:[%s168 + $0xec] sm:$0x7]
          %v251 = vld [vmem:[%s168 + $0xf0] sm:$0x7]
          %v252 = vld [vmem:[%s168 + $0xf4] sm:$0x7]
          %v253 = vld [vmem:[%s168 + $0xf8] sm:$0x7]
          %v254 = vld [vmem:[%s168 + $0xfc] sm:$0x7]
          %v255 = vmul.f32 %v191, %v191
          %v256 = vmul.f32 %v192, %v192
          %v257 = vmul.f32 %v193, %v193
          %v258 = vmul.f32 %v194, %v194
          %v259 = vmul.f32 %v195, %v195
          %v260 = vmul.f32 %v196, %v196
          %v261 = vmul.f32 %v197, %v197
          %v262 = vmul.f32 %v198, %v198
          %v263 = vmul.f32 %v199, %v199
          %v264 = vmul.f32 %v200, %v200
          %v265 = vmul.f32 %v201, %v201
          %v266 = vmul.f32 %v202, %v202
          %v267 = vmul.f32 %v203, %v203
          %v268 = vmul.f32 %v204, %v204
          %v269 = vmul.f32 %v205, %v205
          %v270 = vmul.f32 %v206, %v206
          %v271 = vmul.f32 %v207, %v207
          %v272 = vmul.f32 %v208, %v208
          %v273 = vmul.f32 %v209, %v209
          %v274 = vmul.f32 %v210, %v210
          %v275 = vmul.f32 %v211, %v211
          %v276 = vmul.f32 %v212, %v212
          %v277 = vmul.f32 %v213, %v213
          %v278 = vmul.f32 %v214, %v214
          %v279 = vmul.f32 %v215, %v215
          %v280 = vmul.f32 %v216, %v216
          %v281 = vmul.f32 %v217, %v217
          %v282 = vmul.f32 %v218, %v218
          %v283 = vmul.f32 %v219, %v219
          %v284 = vmul.f32 %v220, %v220
          %v285 = vmul.f32 %v221, %v221
          %v286 = vmul.f32 %v222, %v222
          %v287 = vmul.f32 %v223, %v223
          %v288 = vmul.f32 %v224, %v224
          %v289 = vmul.f32 %v225, %v225
          %v290 = vmul.f32 %v226, %v226
          %v291 = vmul.f32 %v227, %v227
          %v292 = vmul.f32 %v228, %v228
          %v293 = vmul.f32 %v229, %v229
          %v294 = vmul.f32 %v230, %v230
          %v295 = vmul.f32 %v231, %v231
          %v296 = vmul.f32 %v232, %v232
          %v297 = vmul.f32 %v233, %v233
          %v298 = vmul.f32 %v234, %v234
          %v299 = vmul.f32 %v235, %v235
          %v300 = vmul.f32 %v236, %v236
          %v301 = vmul.f32 %v237, %v237
          %v302 = vmul.f32 %v238, %v238
          %v303 = vmul.f32 %v239, %v239
          %v304 = vmul.f32 %v240, %v240
          %v305 = vmul.f32 %v241, %v241
          %v306 = vmul.f32 %v242, %v242
          %v307 = vmul.f32 %v243, %v243
          %v308 = vmul.f32 %v244, %v244
          %v309 = vmul.f32 %v245, %v245
          %v310 = vmul.f32 %v246, %v246
          %v311 = vmul.f32 %v247, %v247
          %v312 = vmul.f32 %v248, %v248
          %v313 = vmul.f32 %v249, %v249
          %v314 = vmul.f32 %v250, %v250
          %v315 = vmul.f32 %v251, %v251
          %v316 = vmul.f32 %v252, %v252
          %v317 = vmul.f32 %v253, %v253
          %v318 = vmul.f32 %v254, %v254
          %v383 = vrot.slane %v255, 1
          %v384 = vrot.slane %v256, 1
          %v385 = vrot.slane %v257, 1
          %v386 = vrot.slane %v258, 1
          %v387 = vrot.slane %v259, 1
          %v388 = vrot.slane %v260, 1
          %v389 = vrot.slane %v261, 1
          %v390 = vrot.slane %v262, 1
          %v391 = vrot.slane %v263, 1
          %v392 = vrot.slane %v264, 1
          %v393 = vrot.slane %v265, 1
          %v394 = vrot.slane %v266, 1
          %v395 = vrot.slane %v267, 1
          %v396 = vrot.slane %v268, 1
          %v397 = vrot.slane %v269, 1
          %v398 = vrot.slane %v270, 1
          %v399 = vrot.slane %v271, 1
          %v400 = vrot.slane %v272, 1
          %v401 = vrot.slane %v273, 1
          %v402 = vrot.slane %v274, 1
          %v403 = vrot.slane %v275, 1
          %v404 = vrot.slane %v276, 1
          %v405 = vrot.slane %v277, 1
          %v406 = vrot.slane %v278, 1
          %v407 = vrot.slane %v279, 1
          %v408 = vrot.slane %v280, 1
          %v409 = vrot.slane %v281, 1
          %v410 = vrot.slane %v282, 1
          %v411 = vrot.slane %v283, 1
          %v412 = vrot.slane %v284, 1
          %v413 = vrot.slane %v285, 1
          %v414 = vrot.slane %v286, 1
          %v415 = vrot.slane %v287, 1
          %v416 = vrot.slane %v288, 1
          %v417 = vrot.slane %v289, 1
          %v418 = vrot.slane %v290, 1
          %v419 = vrot.slane %v291, 1
          %v420 = vrot.slane %v292, 1
          %v421 = vrot.slane %v293, 1
          %v422 = vrot.slane %v294, 1
          %v423 = vrot.slane %v295, 1
          %v424 = vrot.slane %v296, 1
          %v425 = vrot.slane %v297, 1
          %v426 = vrot.slane %v298, 1
          %v427 = vrot.slane %v299, 1
          %v428 = vrot.slane %v300, 1
          %v429 = vrot.slane %v301, 1
          %v430 = vrot.slane %v302, 1
          %v431 = vrot.slane %v303, 1
          %v432 = vrot.slane %v304, 1
          %v433 = vrot.slane %v305, 1
          %v434 = vrot.slane %v306, 1
          %v435 = vrot.slane %v307, 1
          %v436 = vrot.slane %v308, 1
          %v437 = vrot.slane %v309, 1
          %v438 = vrot.slane %v310, 1
          %v439 = vrot.slane %v311, 1
          %v440 = vrot.slane %v312, 1
          %v441 = vrot.slane %v313, 1
          %v442 = vrot.slane %v314, 1
          %v443 = vrot.slane %v315, 1
          %v444 = vrot.slane %v316, 1
          %v445 = vrot.slane %v317, 1
          %v446 = vrot.slane %v318, 1
          %v511 = vadd.f32 %v255, %v383
          %v512 = vadd.f32 %v256, %v384
          %v513 = vadd.f32 %v257, %v385
          %v514 = vadd.f32 %v258, %v386
          %v515 = vadd.f32 %v259, %v387
          %v516 = vadd.f32 %v260, %v388
          %v517 = vadd.f32 %v261, %v389
          %v518 = vadd.f32 %v262, %v390
          %v519 = vadd.f32 %v263, %v391
          %v520 = vadd.f32 %v264, %v392
          %v521 = vadd.f32 %v265, %v393
          %v522 = vadd.f32 %v266, %v394
          %v523 = vadd.f32 %v267, %v395
          %v524 = vadd.f32 %v268, %v396
          %v525 = vadd.f32 %v269, %v397
          %v526 = vadd.f32 %v270, %v398
          %v527 = vadd.f32 %v271, %v399
          %v528 = vadd.f32 %v272, %v400
          %v529 = vadd.f32 %v273, %v401
          %v530 = vadd.f32 %v274, %v402
          %v531 = vadd.f32 %v275, %v403
          %v532 = vadd.f32 %v276, %v404
          %v533 = vadd.f32 %v277, %v405
          %v534 = vadd.f32 %v278, %v406
          %v535 = vadd.f32 %v279, %v407
          %v536 = vadd.f32 %v280, %v408
          %v537 = vadd.f32 %v281, %v409
          %v538 = vadd.f32 %v282, %v410
          %v539 = vadd.f32 %v283, %v411
          %v540 = vadd.f32 %v284, %v412
          %v541 = vadd.f32 %v285, %v413
          %v542 = vadd.f32 %v286, %v414
          %v543 = vadd.f32 %v287, %v415
          %v544 = vadd.f32 %v288, %v416
          %v545 = vadd.f32 %v289, %v417
          %v546 = vadd.f32 %v290, %v418
          %v547 = vadd.f32 %v291, %v419
          %v548 = vadd.f32 %v292, %v420
          %v549 = vadd.f32 %v293, %v421
          %v550 = vadd.f32 %v294, %v422
          %v551 = vadd.f32 %v295, %v423
          %v552 = vadd.f32 %v296, %v424
          %v553 = vadd.f32 %v297, %v425
          %v554 = vadd.f32 %v298, %v426
          %v555 = vadd.f32 %v299, %v427
          %v556 = vadd.f32 %v300, %v428
          %v557 = vadd.f32 %v301, %v429
          %v558 = vadd.f32 %v302, %v430
          %v559 = vadd.f32 %v303, %v431
          %v560 = vadd.f32 %v304, %v432
          %v561 = vadd.f32 %v305, %v433
          %v562 = vadd.f32 %v306, %v434
          %v563 = vadd.f32 %v307, %v435
          %v564 = vadd.f32 %v308, %v436
          %v565 = vadd.f32 %v309, %v437
          %v566 = vadd.f32 %v310, %v438
          %v567 = vadd.f32 %v311, %v439
          %v568 = vadd.f32 %v312, %v440
          %v569 = vadd.f32 %v313, %v441
          %v570 = vadd.f32 %v314, %v442
          %v571 = vadd.f32 %v315, %v443
          %v572 = vadd.f32 %v316, %v444
          %v573 = vadd.f32 %v317, %v445
          %v574 = vadd.f32 %v318, %v446
          %v575 = vrot.slane %v255, 2
          %v576 = vrot.slane %v256, 2
          %v577 = vrot.slane %v257, 2
          %v578 = vrot.slane %v258, 2
          %v579 = vrot.slane %v259, 2
          %v580 = vrot.slane %v260, 2
          %v581 = vrot.slane %v261, 2
          %v582 = vrot.slane %v262, 2
          %v583 = vrot.slane %v263, 2
          %v584 = vrot.slane %v264, 2
          %v585 = vrot.slane %v265, 2
          %v586 = vrot.slane %v266, 2
          %v587 = vrot.slane %v267, 2
          %v588 = vrot.slane %v268, 2
          %v589 = vrot.slane %v269, 2
          %v590 = vrot.slane %v270, 2
          %v591 = vrot.slane %v271, 2
          %v592 = vrot.slane %v272, 2
          %v593 = vrot.slane %v273, 2
          %v594 = vrot.slane %v274, 2
          %v595 = vrot.slane %v275, 2
          %v596 = vrot.slane %v276, 2
          %v597 = vrot.slane %v277, 2
          %v598 = vrot.slane %v278, 2
          %v599 = vrot.slane %v279, 2
          %v600 = vrot.slane %v280, 2
          %v601 = vrot.slane %v281, 2
          %v602 = vrot.slane %v282, 2
          %v603 = vrot.slane %v283, 2
          %v604 = vrot.slane %v284, 2
          %v605 = vrot.slane %v285, 2
          %v606 = vrot.slane %v286, 2
          %v607 = vrot.slane %v287, 2
          %v608 = vrot.slane %v288, 2
          %v609 = vrot.slane %v289, 2
          %v610 = vrot.slane %v290, 2
          %v611 = vrot.slane %v291, 2
          %v612 = vrot.slane %v292, 2
          %v613 = vrot.slane %v293, 2
          %v614 = vrot.slane %v294, 2
          %v615 = vrot.slane %v295, 2
          %v616 = vrot.slane %v296, 2
          %v617 = vrot.slane %v297, 2
          %v618 = vrot.slane %v298, 2
          %v619 = vrot.slane %v299, 2
          %v620 = vrot.slane %v300, 2
          %v621 = vrot.slane %v301, 2
          %v622 = vrot.slane %v302, 2
          %v623 = vrot.slane %v303, 2
          %v624 = vrot.slane %v304, 2
          %v625 = vrot.slane %v305, 2
          %v626 = vrot.slane %v306, 2
          %v627 = vrot.slane %v307, 2
          %v628 = vrot.slane %v308, 2
          %v629 = vrot.slane %v309, 2
          %v630 = vrot.slane %v310, 2
          %v631 = vrot.slane %v311, 2
          %v632 = vrot.slane %v312, 2
          %v633 = vrot.slane %v313, 2
          %v634 = vrot.slane %v314, 2
          %v635 = vrot.slane %v315, 2
          %v636 = vrot.slane %v316, 2
          %v637 = vrot.slane %v317, 2
          %v638 = vrot.slane %v318, 2
          %v703 = vadd.f32 %v511, %v575
          %v704 = vadd.f32 %v512, %v576
          %v705 = vadd.f32 %v513, %v577
          %v706 = vadd.f32 %v514, %v578
          %v707 = vadd.f32 %v515, %v579
          %v708 = vadd.f32 %v516, %v580
          %v709 = vadd.f32 %v517, %v581
          %v710 = vadd.f32 %v518, %v582
          %v711 = vadd.f32 %v519, %v583
          %v712 = vadd.f32 %v520, %v584
          %v713 = vadd.f32 %v521, %v585
          %v714 = vadd.f32 %v522, %v586
          %v715 = vadd.f32 %v523, %v587
          %v716 = vadd.f32 %v524, %v588
          %v717 = vadd.f32 %v525, %v589
          %v718 = vadd.f32 %v526, %v590
          %v719 = vadd.f32 %v527, %v591
          %v720 = vadd.f32 %v528, %v592
          %v721 = vadd.f32 %v529, %v593
          %v722 = vadd.f32 %v530, %v594
          %v723 = vadd.f32 %v531, %v595
          %v724 = vadd.f32 %v532, %v596
          %v725 = vadd.f32 %v533, %v597
          %v726 = vadd.f32 %v534, %v598
          %v727 = vadd.f32 %v535, %v599
          %v728 = vadd.f32 %v536, %v600
          %v729 = vadd.f32 %v537, %v601
          %v730 = vadd.f32 %v538, %v602
          %v731 = vadd.f32 %v539, %v603
          %v732 = vadd.f32 %v540, %v604
          %v733 = vadd.f32 %v541, %v605
          %v734 = vadd.f32 %v542, %v606
          %v735 = vadd.f32 %v543, %v607
          %v736 = vadd.f32 %v544, %v608
          %v737 = vadd.f32 %v545, %v609
          %v738 = vadd.f32 %v546, %v610
          %v739 = vadd.f32 %v547, %v611
          %v740 = vadd.f32 %v548, %v612
          %v741 = vadd.f32 %v549, %v613
          %v742 = vadd.f32 %v550, %v614
          %v743 = vadd.f32 %v551, %v615
          %v744 = vadd.f32 %v552, %v616
          %v745 = vadd.f32 %v553, %v617
          %v746 = vadd.f32 %v554, %v618
          %v747 = vadd.f32 %v555, %v619
          %v748 = vadd.f32 %v556, %v620
          %v749 = vadd.f32 %v557, %v621
          %v750 = vadd.f32 %v558, %v622
          %v751 = vadd.f32 %v559, %v623
          %v752 = vadd.f32 %v560, %v624
          %v753 = vadd.f32 %v561, %v625
          %v754 = vadd.f32 %v562, %v626
          %v755 = vadd.f32 %v563, %v627
          %v756 = vadd.f32 %v564, %v628
          %v757 = vadd.f32 %v565, %v629
          %v758 = vadd.f32 %v566, %v630
          %v759 = vadd.f32 %v567, %v631
          %v760 = vadd.f32 %v568, %v632
          %v761 = vadd.f32 %v569, %v633
          %v762 = vadd.f32 %v570, %v634
          %v763 = vadd.f32 %v571, %v635
          %v764 = vadd.f32 %v572, %v636
          %v765 = vadd.f32 %v573, %v637
          %v766 = vadd.f32 %v574, %v638
          %v767 = vrsqrt.pop %v703
          %v768 = vmul.f32 %v703, %v767
          %vm769 = vcmp.eq.f32.partialorder %v703, inf
          %v770 = vsel %vm769, %v703, %v768
          %vm771 = vcmp.eq.f32.partialorder %v703, 0.0
          %v772 = vand.u32 %v703, 2147483648
          %v773 = vsel %vm771, %v772, %v770
          %v774 = vrsqrt.pop %v704
          %v775 = vmul.f32 %v704, %v774
          %vm776 = vcmp.eq.f32.partialorder %v704, inf
          %v777 = vsel %vm776, %v704, %v775
          %vm778 = vcmp.eq.f32.partialorder %v704, 0.0
          %v779 = vand.u32 %v704, 2147483648
          %v780 = vsel %vm778, %v779, %v777
          %v781 = vrsqrt.pop %v705
          %v782 = vmul.f32 %v705, %v781
          %vm783 = vcmp.eq.f32.partialorder %v705, inf
          %v784 = vsel %vm783, %v705, %v782
          %vm785 = vcmp.eq.f32.partialorder %v705, 0.0
          %v786 = vand.u32 %v705, 2147483648
          %v787 = vsel %vm785, %v786, %v784
          %v788 = vrsqrt.pop %v706
          %v789 = vmul.f32 %v706, %v788
          %vm790 = vcmp.eq.f32.partialorder %v706, inf
          %v791 = vsel %vm790, %v706, %v789
          %vm792 = vcmp.eq.f32.partialorder %v706, 0.0
          %v793 = vand.u32 %v706, 2147483648
          %v794 = vsel %vm792, %v793, %v791
          %v795 = vrsqrt.pop %v707
          %v796 = vmul.f32 %v707, %v795
          %vm797 = vcmp.eq.f32.partialorder %v707, inf
          %v798 = vsel %vm797, %v707, %v796
          %vm799 = vcmp.eq.f32.partialorder %v707, 0.0
          %v800 = vand.u32 %v707, 2147483648
          %v801 = vsel %vm799, %v800, %v798
          %v802 = vrsqrt.pop %v708
          %v803 = vmul.f32 %v708, %v802
          %vm804 = vcmp.eq.f32.partialorder %v708, inf
          %v805 = vsel %vm804, %v708, %v803
          %vm806 = vcmp.eq.f32.partialorder %v708, 0.0
          %v807 = vand.u32 %v708, 2147483648
          %v808 = vsel %vm806, %v807, %v805
          %v809 = vrsqrt.pop %v709
          %v810 = vmul.f32 %v709, %v809
          %vm811 = vcmp.eq.f32.partialorder %v709, inf
          %v812 = vsel %vm811, %v709, %v810
          %vm813 = vcmp.eq.f32.partialorder %v709, 0.0
          %v814 = vand.u32 %v709, 2147483648
          %v815 = vsel %vm813, %v814, %v812
          %v816 = vrsqrt.pop %v710
          %v817 = vmul.f32 %v710, %v816
          %vm818 = vcmp.eq.f32.partialorder %v710, inf
          %v819 = vsel %vm818, %v710, %v817
          %vm820 = vcmp.eq.f32.partialorder %v710, 0.0
          %v821 = vand.u32 %v710, 2147483648
          %v822 = vsel %vm820, %v821, %v819
          %v823 = vrsqrt.pop %v711
          %v824 = vmul.f32 %v711, %v823
          %vm825 = vcmp.eq.f32.partialorder %v711, inf
          %v826 = vsel %vm825, %v711, %v824
          %vm827 = vcmp.eq.f32.partialorder %v711, 0.0
          %v828 = vand.u32 %v711, 2147483648
          %v829 = vsel %vm827, %v828, %v826
          %v830 = vrsqrt.pop %v712
          %v831 = vmul.f32 %v712, %v830
          %vm832 = vcmp.eq.f32.partialorder %v712, inf
          %v833 = vsel %vm832, %v712, %v831
          %vm834 = vcmp.eq.f32.partialorder %v712, 0.0
          %v835 = vand.u32 %v712, 2147483648
          %v836 = vsel %vm834, %v835, %v833
          %v837 = vrsqrt.pop %v713
          %v838 = vmul.f32 %v713, %v837
          %vm839 = vcmp.eq.f32.partialorder %v713, inf
          %v840 = vsel %vm839, %v713, %v838
          %vm841 = vcmp.eq.f32.partialorder %v713, 0.0
          %v842 = vand.u32 %v713, 2147483648
          %v843 = vsel %vm841, %v842, %v840
          %v844 = vrsqrt.pop %v714
          %v845 = vmul.f32 %v714, %v844
          %vm846 = vcmp.eq.f32.partialorder %v714, inf
          %v847 = vsel %vm846, %v714, %v845
          %vm848 = vcmp.eq.f32.partialorder %v714, 0.0
          %v849 = vand.u32 %v714, 2147483648
          %v850 = vsel %vm848, %v849, %v847
          %v851 = vrsqrt.pop %v715
          %v852 = vmul.f32 %v715, %v851
          %vm853 = vcmp.eq.f32.partialorder %v715, inf
          %v854 = vsel %vm853, %v715, %v852
          %vm855 = vcmp.eq.f32.partialorder %v715, 0.0
          %v856 = vand.u32 %v715, 2147483648
          %v857 = vsel %vm855, %v856, %v854
          %v858 = vrsqrt.pop %v716
          %v859 = vmul.f32 %v716, %v858
          %vm860 = vcmp.eq.f32.partialorder %v716, inf
          %v861 = vsel %vm860, %v716, %v859
          %vm862 = vcmp.eq.f32.partialorder %v716, 0.0
          %v863 = vand.u32 %v716, 2147483648
          %v864 = vsel %vm862, %v863, %v861
          %v865 = vrsqrt.pop %v717
          %v866 = vmul.f32 %v717, %v865
          %vm867 = vcmp.eq.f32.partialorder %v717, inf
          %v868 = vsel %vm867, %v717, %v866
          %vm869 = vcmp.eq.f32.partialorder %v717, 0.0
          %v870 = vand.u32 %v717, 2147483648
          %v871 = vsel %vm869, %v870, %v868
          %v872 = vrsqrt.pop %v718
          %v873 = vmul.f32 %v718, %v872
          %vm874 = vcmp.eq.f32.partialorder %v718, inf
          %v875 = vsel %vm874, %v718, %v873
          %vm876 = vcmp.eq.f32.partialorder %v718, 0.0
          %v877 = vand.u32 %v718, 2147483648
          %v878 = vsel %vm876, %v877, %v875
          %v879 = vrsqrt.pop %v719
          %v880 = vmul.f32 %v719, %v879
          %vm881 = vcmp.eq.f32.partialorder %v719, inf
          %v882 = vsel %vm881, %v719, %v880
          %vm883 = vcmp.eq.f32.partialorder %v719, 0.0
          %v884 = vand.u32 %v719, 2147483648
          %v885 = vsel %vm883, %v884, %v882
          %v886 = vrsqrt.pop %v720
          %v887 = vmul.f32 %v720, %v886
          %vm888 = vcmp.eq.f32.partialorder %v720, inf
          %v889 = vsel %vm888, %v720, %v887
          %vm890 = vcmp.eq.f32.partialorder %v720, 0.0
          %v891 = vand.u32 %v720, 2147483648
          %v892 = vsel %vm890, %v891, %v889
          %v893 = vrsqrt.pop %v721
          %v894 = vmul.f32 %v721, %v893
          %vm895 = vcmp.eq.f32.partialorder %v721, inf
          %v896 = vsel %vm895, %v721, %v894
          %vm897 = vcmp.eq.f32.partialorder %v721, 0.0
          %v898 = vand.u32 %v721, 2147483648
          %v899 = vsel %vm897, %v898, %v896
          %v900 = vrsqrt.pop %v722
          %v901 = vmul.f32 %v722, %v900
          %vm902 = vcmp.eq.f32.partialorder %v722, inf
          %v903 = vsel %vm902, %v722, %v901
          %vm904 = vcmp.eq.f32.partialorder %v722, 0.0
          %v905 = vand.u32 %v722, 2147483648
          %v906 = vsel %vm904, %v905, %v903
          %v907 = vrsqrt.pop %v723
          %v908 = vmul.f32 %v723, %v907
          %vm909 = vcmp.eq.f32.partialorder %v723, inf
          %v910 = vsel %vm909, %v723, %v908
          %vm911 = vcmp.eq.f32.partialorder %v723, 0.0
          %v912 = vand.u32 %v723, 2147483648
          %v913 = vsel %vm911, %v912, %v910
          %v914 = vrsqrt.pop %v724
          %v915 = vmul.f32 %v724, %v914
          %vm916 = vcmp.eq.f32.partialorder %v724, inf
          %v917 = vsel %vm916, %v724, %v915
          %vm918 = vcmp.eq.f32.partialorder %v724, 0.0
          %v919 = vand.u32 %v724, 2147483648
          %v920 = vsel %vm918, %v919, %v917
          %v921 = vrsqrt.pop %v725
          %v922 = vmul.f32 %v725, %v921
          %vm923 = vcmp.eq.f32.partialorder %v725, inf
          %v924 = vsel %vm923, %v725, %v922
          %vm925 = vcmp.eq.f32.partialorder %v725, 0.0
          %v926 = vand.u32 %v725, 2147483648
          %v927 = vsel %vm925, %v926, %v924
          %v928 = vrsqrt.pop %v726
          %v929 = vmul.f32 %v726, %v928
          %vm930 = vcmp.eq.f32.partialorder %v726, inf
          %v931 = vsel %vm930, %v726, %v929
          %vm932 = vcmp.eq.f32.partialorder %v726, 0.0
          %v933 = vand.u32 %v726, 2147483648
          %v934 = vsel %vm932, %v933, %v931
          %v935 = vrsqrt.pop %v727
          %v936 = vmul.f32 %v727, %v935
          %vm937 = vcmp.eq.f32.partialorder %v727, inf
          %v938 = vsel %vm937, %v727, %v936
          %vm939 = vcmp.eq.f32.partialorder %v727, 0.0
          %v940 = vand.u32 %v727, 2147483648
          %v941 = vsel %vm939, %v940, %v938
          %v942 = vrsqrt.pop %v728
          %v943 = vmul.f32 %v728, %v942
          %vm944 = vcmp.eq.f32.partialorder %v728, inf
          %v945 = vsel %vm944, %v728, %v943
          %vm946 = vcmp.eq.f32.partialorder %v728, 0.0
          %v947 = vand.u32 %v728, 2147483648
          %v948 = vsel %vm946, %v947, %v945
          %v949 = vrsqrt.pop %v729
          %v950 = vmul.f32 %v729, %v949
          %vm951 = vcmp.eq.f32.partialorder %v729, inf
          %v952 = vsel %vm951, %v729, %v950
          %vm953 = vcmp.eq.f32.partialorder %v729, 0.0
          %v954 = vand.u32 %v729, 2147483648
          %v955 = vsel %vm953, %v954, %v952
          %v956 = vrsqrt.pop %v730
          %v957 = vmul.f32 %v730, %v956
          %vm958 = vcmp.eq.f32.partialorder %v730, inf
          %v959 = vsel %vm958, %v730, %v957
          %vm960 = vcmp.eq.f32.partialorder %v730, 0.0
          %v961 = vand.u32 %v730, 2147483648
          %v962 = vsel %vm960, %v961, %v959
          %v963 = vrsqrt.pop %v731
          %v964 = vmul.f32 %v731, %v963
          %vm965 = vcmp.eq.f32.partialorder %v731, inf
          %v966 = vsel %vm965, %v731, %v964
          %vm967 = vcmp.eq.f32.partialorder %v731, 0.0
          %v968 = vand.u32 %v731, 2147483648
          %v969 = vsel %vm967, %v968, %v966
          %v970 = vrsqrt.pop %v732
          %v971 = vmul.f32 %v732, %v970
          %vm972 = vcmp.eq.f32.partialorder %v732, inf
          %v973 = vsel %vm972, %v732, %v971
          %vm974 = vcmp.eq.f32.partialorder %v732, 0.0
          %v975 = vand.u32 %v732, 2147483648
          %v976 = vsel %vm974, %v975, %v973
          %v977 = vrsqrt.pop %v733
          %v978 = vmul.f32 %v733, %v977
          %vm979 = vcmp.eq.f32.partialorder %v733, inf
          %v980 = vsel %vm979, %v733, %v978
          %vm981 = vcmp.eq.f32.partialorder %v733, 0.0
          %v982 = vand.u32 %v733, 2147483648
          %v983 = vsel %vm981, %v982, %v980
          %v984 = vrsqrt.pop %v734
          %v985 = vmul.f32 %v734, %v984
          %vm986 = vcmp.eq.f32.partialorder %v734, inf
          %v987 = vsel %vm986, %v734, %v985
          %vm988 = vcmp.eq.f32.partialorder %v734, 0.0
          %v989 = vand.u32 %v734, 2147483648
          %v990 = vsel %vm988, %v989, %v987
          %v991 = vrsqrt.pop %v735
          %v992 = vmul.f32 %v735, %v991
          %vm993 = vcmp.eq.f32.partialorder %v735, inf
          %v994 = vsel %vm993, %v735, %v992
          %vm995 = vcmp.eq.f32.partialorder %v735, 0.0
          %v996 = vand.u32 %v735, 2147483648
          %v997 = vsel %vm995, %v996, %v994
          %v998 = vrsqrt.pop %v736
          %v999 = vmul.f32 %v736, %v998
          %vm1000 = vcmp.eq.f32.partialorder %v736, inf
          %v1001 = vsel %vm1000, %v736, %v999
          %vm1002 = vcmp.eq.f32.partialorder %v736, 0.0
          %v1003 = vand.u32 %v736, 2147483648
          %v1004 = vsel %vm1002, %v1003, %v1001
          %v1005 = vrsqrt.pop %v737
          %v1006 = vmul.f32 %v737, %v1005
          %vm1007 = vcmp.eq.f32.partialorder %v737, inf
          %v1008 = vsel %vm1007, %v737, %v1006
          %vm1009 = vcmp.eq.f32.partialorder %v737, 0.0
          %v1010 = vand.u32 %v737, 2147483648
          %v1011 = vsel %vm1009, %v1010, %v1008
          %v1012 = vrsqrt.pop %v738
          %v1013 = vmul.f32 %v738, %v1012
          %vm1014 = vcmp.eq.f32.partialorder %v738, inf
          %v1015 = vsel %vm1014, %v738, %v1013
          %vm1016 = vcmp.eq.f32.partialorder %v738, 0.0
          %v1017 = vand.u32 %v738, 2147483648
          %v1018 = vsel %vm1016, %v1017, %v1015
          %v1019 = vrsqrt.pop %v739
          %v1020 = vmul.f32 %v739, %v1019
          %vm1021 = vcmp.eq.f32.partialorder %v739, inf
          %v1022 = vsel %vm1021, %v739, %v1020
          %vm1023 = vcmp.eq.f32.partialorder %v739, 0.0
          %v1024 = vand.u32 %v739, 2147483648
          %v1025 = vsel %vm1023, %v1024, %v1022
          %v1026 = vrsqrt.pop %v740
          %v1027 = vmul.f32 %v740, %v1026
          %vm1028 = vcmp.eq.f32.partialorder %v740, inf
          %v1029 = vsel %vm1028, %v740, %v1027
          %vm1030 = vcmp.eq.f32.partialorder %v740, 0.0
          %v1031 = vand.u32 %v740, 2147483648
          %v1032 = vsel %vm1030, %v1031, %v1029
          %v1033 = vrsqrt.pop %v741
          %v1034 = vmul.f32 %v741, %v1033
          %vm1035 = vcmp.eq.f32.partialorder %v741, inf
          %v1036 = vsel %vm1035, %v741, %v1034
          %vm1037 = vcmp.eq.f32.partialorder %v741, 0.0
          %v1038 = vand.u32 %v741, 2147483648
          %v1039 = vsel %vm1037, %v1038, %v1036
          %v1040 = vrsqrt.pop %v742
          %v1041 = vmul.f32 %v742, %v1040
          %vm1042 = vcmp.eq.f32.partialorder %v742, inf
          %v1043 = vsel %vm1042, %v742, %v1041
          %vm1044 = vcmp.eq.f32.partialorder %v742, 0.0
          %v1045 = vand.u32 %v742, 2147483648
          %v1046 = vsel %vm1044, %v1045, %v1043
          %v1047 = vrsqrt.pop %v743
          %v1048 = vmul.f32 %v743, %v1047
          %vm1049 = vcmp.eq.f32.partialorder %v743, inf
          %v1050 = vsel %vm1049, %v743, %v1048
          %vm1051 = vcmp.eq.f32.partialorder %v743, 0.0
          %v1052 = vand.u32 %v743, 2147483648
          %v1053 = vsel %vm1051, %v1052, %v1050
          %v1054 = vrsqrt.pop %v744
          %v1055 = vmul.f32 %v744, %v1054
          %vm1056 = vcmp.eq.f32.partialorder %v744, inf
          %v1057 = vsel %vm1056, %v744, %v1055
          %vm1058 = vcmp.eq.f32.partialorder %v744, 0.0
          %v1059 = vand.u32 %v744, 2147483648
          %v1060 = vsel %vm1058, %v1059, %v1057
          %v1061 = vrsqrt.pop %v745
          %v1062 = vmul.f32 %v745, %v1061
          %vm1063 = vcmp.eq.f32.partialorder %v745, inf
          %v1064 = vsel %vm1063, %v745, %v1062
          %vm1065 = vcmp.eq.f32.partialorder %v745, 0.0
          %v1066 = vand.u32 %v745, 2147483648
          %v1067 = vsel %vm1065, %v1066, %v1064
          %v1068 = vrsqrt.pop %v746
          %v1069 = vmul.f32 %v746, %v1068
          %vm1070 = vcmp.eq.f32.partialorder %v746, inf
          %v1071 = vsel %vm1070, %v746, %v1069
          %vm1072 = vcmp.eq.f32.partialorder %v746, 0.0
          %v1073 = vand.u32 %v746, 2147483648
          %v1074 = vsel %vm1072, %v1073, %v1071
          %v1075 = vrsqrt.pop %v747
          %v1076 = vmul.f32 %v747, %v1075
          %vm1077 = vcmp.eq.f32.partialorder %v747, inf
          %v1078 = vsel %vm1077, %v747, %v1076
          %vm1079 = vcmp.eq.f32.partialorder %v747, 0.0
          %v1080 = vand.u32 %v747, 2147483648
          %v1081 = vsel %vm1079, %v1080, %v1078
          %v1082 = vrsqrt.pop %v748
          %v1083 = vmul.f32 %v748, %v1082
          %vm1084 = vcmp.eq.f32.partialorder %v748, inf
          %v1085 = vsel %vm1084, %v748, %v1083
          %vm1086 = vcmp.eq.f32.partialorder %v748, 0.0
          %v1087 = vand.u32 %v748, 2147483648
          %v1088 = vsel %vm1086, %v1087, %v1085
          %v1089 = vrsqrt.pop %v749
          %v1090 = vmul.f32 %v749, %v1089
          %vm1091 = vcmp.eq.f32.partialorder %v749, inf
          %v1092 = vsel %vm1091, %v749, %v1090
          %vm1093 = vcmp.eq.f32.partialorder %v749, 0.0
          %v1094 = vand.u32 %v749, 2147483648
          %v1095 = vsel %vm1093, %v1094, %v1092
          %v1096 = vrsqrt.pop %v750
          %v1097 = vmul.f32 %v750, %v1096
          %vm1098 = vcmp.eq.f32.partialorder %v750, inf
          %v1099 = vsel %vm1098, %v750, %v1097
          %vm1100 = vcmp.eq.f32.partialorder %v750, 0.0
          %v1101 = vand.u32 %v750, 2147483648
          %v1102 = vsel %vm1100, %v1101, %v1099
          %v1103 = vrsqrt.pop %v751
          %v1104 = vmul.f32 %v751, %v1103
          %vm1105 = vcmp.eq.f32.partialorder %v751, inf
          %v1106 = vsel %vm1105, %v751, %v1104
          %vm1107 = vcmp.eq.f32.partialorder %v751, 0.0
          %v1108 = vand.u32 %v751, 2147483648
          %v1109 = vsel %vm1107, %v1108, %v1106
          %v1110 = vrsqrt.pop %v752
          %v1111 = vmul.f32 %v752, %v1110
          %vm1112 = vcmp.eq.f32.partialorder %v752, inf
          %v1113 = vsel %vm1112, %v752, %v1111
          %vm1114 = vcmp.eq.f32.partialorder %v752, 0.0
          %v1115 = vand.u32 %v752, 2147483648
          %v1116 = vsel %vm1114, %v1115, %v1113
          %v1117 = vrsqrt.pop %v753
          %v1118 = vmul.f32 %v753, %v1117
          %vm1119 = vcmp.eq.f32.partialorder %v753, inf
          %v1120 = vsel %vm1119, %v753, %v1118
          %vm1121 = vcmp.eq.f32.partialorder %v753, 0.0
          %v1122 = vand.u32 %v753, 2147483648
          %v1123 = vsel %vm1121, %v1122, %v1120
          %v1124 = vrsqrt.pop %v754
          %v1125 = vmul.f32 %v754, %v1124
          %vm1126 = vcmp.eq.f32.partialorder %v754, inf
          %v1127 = vsel %vm1126, %v754, %v1125
          %vm1128 = vcmp.eq.f32.partialorder %v754, 0.0
          %v1129 = vand.u32 %v754, 2147483648
          %v1130 = vsel %vm1128, %v1129, %v1127
          %v1131 = vrsqrt.pop %v755
          %v1132 = vmul.f32 %v755, %v1131
          %vm1133 = vcmp.eq.f32.partialorder %v755, inf
          %v1134 = vsel %vm1133, %v755, %v1132
          %vm1135 = vcmp.eq.f32.partialorder %v755, 0.0
          %v1136 = vand.u32 %v755, 2147483648
          %v1137 = vsel %vm1135, %v1136, %v1134
          %v1138 = vrsqrt.pop %v756
          %v1139 = vmul.f32 %v756, %v1138
          %vm1140 = vcmp.eq.f32.partialorder %v756, inf
          %v1141 = vsel %vm1140, %v756, %v1139
          %vm1142 = vcmp.eq.f32.partialorder %v756, 0.0
          %v1143 = vand.u32 %v756, 2147483648
          %v1144 = vsel %vm1142, %v1143, %v1141
          %v1145 = vrsqrt.pop %v757
          %v1146 = vmul.f32 %v757, %v1145
          %vm1147 = vcmp.eq.f32.partialorder %v757, inf
          %v1148 = vsel %vm1147, %v757, %v1146
          %vm1149 = vcmp.eq.f32.partialorder %v757, 0.0
          %v1150 = vand.u32 %v757, 2147483648
          %v1151 = vsel %vm1149, %v1150, %v1148
          %v1152 = vrsqrt.pop %v758
          %v1153 = vmul.f32 %v758, %v1152
          %vm1154 = vcmp.eq.f32.partialorder %v758, inf
          %v1155 = vsel %vm1154, %v758, %v1153
          %vm1156 = vcmp.eq.f32.partialorder %v758, 0.0
          %v1157 = vand.u32 %v758, 2147483648
          %v1158 = vsel %vm1156, %v1157, %v1155
          %v1159 = vrsqrt.pop %v759
          %v1160 = vmul.f32 %v759, %v1159
          %vm1161 = vcmp.eq.f32.partialorder %v759, inf
          %v1162 = vsel %vm1161, %v759, %v1160
          %vm1163 = vcmp.eq.f32.partialorder %v759, 0.0
          %v1164 = vand.u32 %v759, 2147483648
          %v1165 = vsel %vm1163, %v1164, %v1162
          %v1166 = vrsqrt.pop %v760
          %v1167 = vmul.f32 %v760, %v1166
          %vm1168 = vcmp.eq.f32.partialorder %v760, inf
          %v1169 = vsel %vm1168, %v760, %v1167
          %vm1170 = vcmp.eq.f32.partialorder %v760, 0.0
          %v1171 = vand.u32 %v760, 2147483648
          %v1172 = vsel %vm1170, %v1171, %v1169
          %v1173 = vrsqrt.pop %v761
          %v1174 = vmul.f32 %v761, %v1173
          %vm1175 = vcmp.eq.f32.partialorder %v761, inf
          %v1176 = vsel %vm1175, %v761, %v1174
          %vm1177 = vcmp.eq.f32.partialorder %v761, 0.0
          %v1178 = vand.u32 %v761, 2147483648
          %v1179 = vsel %vm1177, %v1178, %v1176
          %v1180 = vrsqrt.pop %v762
          %v1181 = vmul.f32 %v762, %v1180
          %vm1182 = vcmp.eq.f32.partialorder %v762, inf
          %v1183 = vsel %vm1182, %v762, %v1181
          %vm1184 = vcmp.eq.f32.partialorder %v762, 0.0
          %v1185 = vand.u32 %v762, 2147483648
          %v1186 = vsel %vm1184, %v1185, %v1183
          %v1187 = vrsqrt.pop %v763
          %v1188 = vmul.f32 %v763, %v1187
          %vm1189 = vcmp.eq.f32.partialorder %v763, inf
          %v1190 = vsel %vm1189, %v763, %v1188
          %vm1191 = vcmp.eq.f32.partialorder %v763, 0.0
          %v1192 = vand.u32 %v763, 2147483648
          %v1193 = vsel %vm1191, %v1192, %v1190
          %v1194 = vrsqrt.pop %v764
          %v1195 = vmul.f32 %v764, %v1194
          %vm1196 = vcmp.eq.f32.partialorder %v764, inf
          %v1197 = vsel %vm1196, %v764, %v1195
          %vm1198 = vcmp.eq.f32.partialorder %v764, 0.0
          %v1199 = vand.u32 %v764, 2147483648
          %v1200 = vsel %vm1198, %v1199, %v1197
          %v1201 = vrsqrt.pop %v765
          %v1202 = vmul.f32 %v765, %v1201
          %vm1203 = vcmp.eq.f32.partialorder %v765, inf
          %v1204 = vsel %vm1203, %v765, %v1202
          %vm1205 = vcmp.eq.f32.partialorder %v765, 0.0
          %v1206 = vand.u32 %v765, 2147483648
          %v1207 = vsel %vm1205, %v1206, %v1204
          %v1208 = vrsqrt.pop %v766
          %v1209 = vmul.f32 %v766, %v1208
          %vm1210 = vcmp.eq.f32.partialorder %v766, inf
          %v1211 = vsel %vm1210, %v766, %v1209
          %vm1212 = vcmp.eq.f32.partialorder %v766, 0.0
          %v1213 = vand.u32 %v766, 2147483648
          %v1214 = vsel %vm1212, %v1213, %v1211
          %v1215 = vlaneseq
          %v1216 = vshrl.u32 %v1215, 7
          %v1217 = vadd.s32 %v1216, 8
          %v1218 = vadd.s32 %v1216, 16
          %v1219 = vadd.s32 %v1216, 24
          %v1220 = vadd.s32 %v1216, 32
          %v1221 = vadd.s32 %v1216, 40
          %v1222 = vadd.s32 %v1216, 48
          %v1223 = vadd.s32 %v1216, 56
          %s1224 = smul.u32 %s18, 64
          %v1225 = vstv %s1224
          %v1226 = vadd.s32 %v1216, %v1225
          %v1227 = vadd.s32 %v1217, %v1225
          %v1228 = vadd.s32 %v1218, %v1225
          %v1229 = vadd.s32 %v1219, %v1225
          %v1230 = vadd.s32 %v1220, %v1225
          %v1231 = vadd.s32 %v1221, %v1225
          %v1232 = vadd.s32 %v1222, %v1225
          %v1233 = vadd.s32 %v1223, %v1225
          %vm1234 = vcmp.lt.s32.totalorder %v1226, 300
          %vm1235 = vcmp.lt.s32.totalorder %v1227, 300
          %vm1236 = vcmp.lt.s32.totalorder %v1228, 300
          %vm1237 = vcmp.lt.s32.totalorder %v1229, 300
          %vm1238 = vcmp.lt.s32.totalorder %v1230, 300
          %vm1239 = vcmp.lt.s32.totalorder %v1231, 300
          %vm1240 = vcmp.lt.s32.totalorder %v1232, 300
          %vm1241 = vcmp.lt.s32.totalorder %v1233, 300
          %v1306 = vrot.slane %v780, 7
          %vm1307 = vcmask 1041409
          %v1308 = vsel %vm1307, %v1306, %v773
          %v1309 = vrot.slane %v787, 6
          %vm1310 = vcmask 1042434
          %v1311 = vsel %vm1310, %v1309, %v1308
          %v1312 = vrot.slane %v794, 5
          %vm1313 = vcmask 1043459
          %v1314 = vsel %vm1313, %v1312, %v1311
          %v1315 = vrot.slane %v801, 4
          %vm1316 = vcmask 1044484
          %v1317 = vsel %vm1316, %v1315, %v1314
          %v1318 = vrot.slane %v808, 3
          %vm1319 = vcmask 1045509
          %v1320 = vsel %vm1319, %v1318, %v1317
          %v1321 = vrot.slane %v815, 2
          %vm1322 = vcmask 1046534
          %v1323 = vsel %vm1322, %v1321, %v1320
          %v1324 = vrot.slane %v822, 1
          %vm1325 = vcmask 1047559
          %v1326 = vsel %vm1325, %v1324, %v1323
          %v1327 = vrot.slane %v836, 7
          %v1328 = vsel %vm1307, %v1327, %v829
          %v1329 = vrot.slane %v843, 6
          %v1330 = vsel %vm1310, %v1329, %v1328
          %v1331 = vrot.slane %v850, 5
          %v1332 = vsel %vm1313, %v1331, %v1330
          %v1333 = vrot.slane %v857, 4
          %v1334 = vsel %vm1316, %v1333, %v1332
          %v1335 = vrot.slane %v864, 3
          %v1336 = vsel %vm1319, %v1335, %v1334
          %v1337 = vrot.slane %v871, 2
          %v1338 = vsel %vm1322, %v1337, %v1336
          %v1339 = vrot.slane %v878, 1
          %v1340 = vsel %vm1325, %v1339, %v1338
          %v1341 = vrot.slane %v892, 7
          %v1342 = vsel %vm1307, %v1341, %v885
          %v1343 = vrot.slane %v899, 6
          %v1344 = vsel %vm1310, %v1343, %v1342
          %v1345 = vrot.slane %v906, 5
          %v1346 = vsel %vm1313, %v1345, %v1344
          %v1347 = vrot.slane %v913, 4
          %v1348 = vsel %vm1316, %v1347, %v1346
          %v1349 = vrot.slane %v920, 3
          %v1350 = vsel %vm1319, %v1349, %v1348
          %v1351 = vrot.slane %v927, 2
          %v1352 = vsel %vm1322, %v1351, %v1350
          %v1353 = vrot.slane %v934, 1
          %v1354 = vsel %vm1325, %v1353, %v1352
          %v1355 = vrot.slane %v948, 7
          %v1356 = vsel %vm1307, %v1355, %v941
          %v1357 = vrot.slane %v955, 6
          %v1358 = vsel %vm1310, %v1357, %v1356
          %v1359 = vrot.slane %v962, 5
          %v1360 = vsel %vm1313, %v1359, %v1358
          %v1361 = vrot.slane %v969, 4
          %v1362 = vsel %vm1316, %v1361, %v1360
          %v1363 = vrot.slane %v976, 3
          %v1364 = vsel %vm1319, %v1363, %v1362
          %v1365 = vrot.slane %v983, 2
          %v1366 = vsel %vm1322, %v1365, %v1364
          %v1367 = vrot.slane %v990, 1
          %v1368 = vsel %vm1325, %v1367, %v1366
          %v1369 = vrot.slane %v1004, 7
          %v1370 = vsel %vm1307, %v1369, %v997
          %v1371 = vrot.slane %v1011, 6
          %v1372 = vsel %vm1310, %v1371, %v1370
          %v1373 = vrot.slane %v1018, 5
          %v1374 = vsel %vm1313, %v1373, %v1372
          %v1375 = vrot.slane %v1025, 4
          %v1376 = vsel %vm1316, %v1375, %v1374
          %v1377 = vrot.slane %v1032, 3
          %v1378 = vsel %vm1319, %v1377, %v1376
          %v1379 = vrot.slane %v1039, 2
          %v1380 = vsel %vm1322, %v1379, %v1378
          %v1381 = vrot.slane %v1046, 1
          %v1382 = vsel %vm1325, %v1381, %v1380
          %v1383 = vrot.slane %v1060, 7
          %v1384 = vsel %vm1307, %v1383, %v1053
          %v1385 = vrot.slane %v1067, 6
          %v1386 = vsel %vm1310, %v1385, %v1384
          %v1387 = vrot.slane %v1074, 5
          %v1388 = vsel %vm1313, %v1387, %v1386
          %v1389 = vrot.slane %v1081, 4
          %v1390 = vsel %vm1316, %v1389, %v1388
          %v1391 = vrot.slane %v1088, 3
          %v1392 = vsel %vm1319, %v1391, %v1390
          %v1393 = vrot.slane %v1095, 2
          %v1394 = vsel %vm1322, %v1393, %v1392
          %v1395 = vrot.slane %v1102, 1
          %v1396 = vsel %vm1325, %v1395, %v1394
          %v1397 = vrot.slane %v1116, 7
          %v1398 = vsel %vm1307, %v1397, %v1109
          %v1399 = vrot.slane %v1123, 6
          %v1400 = vsel %vm1310, %v1399, %v1398
          %v1401 = vrot.slane %v1130, 5
          %v1402 = vsel %vm1313, %v1401, %v1400
          %v1403 = vrot.slane %v1137, 4
          %v1404 = vsel %vm1316, %v1403, %v1402
          %v1405 = vrot.slane %v1144, 3
          %v1406 = vsel %vm1319, %v1405, %v1404
          %v1407 = vrot.slane %v1151, 2
          %v1408 = vsel %vm1322, %v1407, %v1406
          %v1409 = vrot.slane %v1158, 1
          %v1410 = vsel %vm1325, %v1409, %v1408
          %v1411 = vrot.slane %v1172, 7
          %v1412 = vsel %vm1307, %v1411, %v1165
          %v1413 = vrot.slane %v1179, 6
          %v1414 = vsel %vm1310, %v1413, %v1412
          %v1415 = vrot.slane %v1186, 5
          %v1416 = vsel %vm1313, %v1415, %v1414
          %v1417 = vrot.slane %v1193, 4
          %v1418 = vsel %vm1316, %v1417, %v1416
          %v1419 = vrot.slane %v1200, 3
          %v1420 = vsel %vm1319, %v1419, %v1418
          %v1421 = vrot.slane %v1207, 2
          %v1422 = vsel %vm1322, %v1421, %v1420
          %v1423 = vrot.slane %v1214, 1
          %v1424 = vsel %vm1325, %v1423, %v1422
          %v1433 = vsel %vm1234, %v1326, 0.0
          %v1434 = vsel %vm1235, %v1340, 0.0
          %v1435 = vsel %vm1236, %v1354, 0.0
          %v1436 = vsel %vm1237, %v1368, 0.0
          %v1437 = vsel %vm1238, %v1382, 0.0
          %v1438 = vsel %vm1239, %v1396, 0.0
          %v1439 = vsel %vm1240, %v1410, 0.0
          %v1440 = vsel %vm1241, %v1424, 0.0
          %v1441 = vld [vmem:[#allocation2] sm:$0x1]
          %vm1442 = vcmask 261120
          %v1443 = vsel %vm1442, %v1433, 0.0
          %v1444 = vsel %vm1442, %v1434, 0.0
          %v1445 = vadd.f32 %v1443, %v1444
          %v1446 = vsel %vm1442, %v1435, 0.0
          %v1447 = vadd.f32 %v1445, %v1446
          %v1448 = vsel %vm1442, %v1436, 0.0
          %v1449 = vadd.f32 %v1447, %v1448
          %v1450 = vsel %vm1442, %v1437, 0.0
          %v1451 = vadd.f32 %v1449, %v1450
          %v1452 = vsel %vm1442, %v1438, 0.0
          %v1453 = vadd.f32 %v1451, %v1452
          %v1454 = vsel %vm1442, %v1439, 0.0
          %v1455 = vadd.f32 %v1453, %v1454
          %v1456 = vsel %vm1442, %v1440, 0.0
          %v1457 = vadd.f32 %v1455, %v1456
          %v1458 = vrot.slane %v1457, 4
          %v1459 = vadd.f32 %v1457, %v1458
          %v1460 = vrot.slane %v1459, 2
          %v1461 = vadd.f32 %v1459, %v1460
          %v1462 = vrot.slane %v1461, 1
          %v1463 = vadd.f32 %v1461, %v1462
          %v1464 = vadd.f32 %v1441, %v1463
          %vm1465 = vcmask 253952
          %1466 = vst.msk [vmem:[#allocation2] sm:$0x1] %vm1465, %v1464
        $region36: #{tpu_custom_call.1} parent=27 // pred_fallthru
          _
        %p1467 = scmp.eq.s32.totalorder %s17, 1
        %p1468 = pnand %p1467, %p181
        %p1469 = pneg %p1468
        // Predicated region
        $region37: #{tpu_custom_call.1} parent=27 // pred_check
          _
        $region38: #{tpu_custom_call.1} parent=27 // pred_check_branch
          %1471 = sbr.rel (%p1468) target = $region40
        $region39: #{tpu_custom_call.1} parent=27 // pred_region
          %v1472 = vld [vmem:[%s0] sm:$0x1]
          %v1473 = vld [vmem:[#allocation2] sm:$0x1]
          %v1474 = vmul.f32 %v1473, 0.0033333334
          %v1475 = vadd.f32 %v1474, 1e-05
          %v1476 = vrcp.pop %v1475
          %v1477 = vmul.f32 %v1472, %v1476
          %vm1478 = vcmask 253952
          %1479 = vst.msk [vmem:[#allocation3] sm:$0x1] %vm1478, %v1477
        $region40: #{tpu_custom_call.1} parent=27 // pred_fallthru
          _
        // Predicated region
        $region41: #{tpu_custom_call.1} parent=27 // pred_check
          %p1480 = pneg %p1467
        $region42: #{tpu_custom_call.1} parent=27 // pred_check_branch
          %1482 = sbr.rel (%p1480) target = $region44
        $region43: #{tpu_custom_call.1} parent=27 // pred_region
          %v1483 = vld [vmem:[%s168] sm:$0x7]
          %v1484 = vld [vmem:[%s168 + $0x4] sm:$0x7]
          %v1485 = vld [vmem:[%s168 + $0x8] sm:$0x7]
          %v1486 = vld [vmem:[%s168 + $0xc] sm:$0x7]
          %v1487 = vld [vmem:[%s168 + $0x10] sm:$0x7]
          %v1488 = vld [vmem:[%s168 + $0x14] sm:$0x7]
          %v1489 = vld [vmem:[%s168 + $0x18] sm:$0x7]
          %v1490 = vld [vmem:[%s168 + $0x1c] sm:$0x7]
          %v1491 = vld [vmem:[%s168 + $0x20] sm:$0x7]
          %v1492 = vld [vmem:[%s168 + $0x24] sm:$0x7]
          %v1493 = vld [vmem:[%s168 + $0x28] sm:$0x7]
          %v1494 = vld [vmem:[%s168 + $0x2c] sm:$0x7]
          %v1495 = vld [vmem:[%s168 + $0x30] sm:$0x7]
          %v1496 = vld [vmem:[%s168 + $0x34] sm:$0x7]
          %v1497 = vld [vmem:[%s168 + $0x38] sm:$0x7]
          %v1498 = vld [vmem:[%s168 + $0x3c] sm:$0x7]
          %v1499 = vld [vmem:[%s168 + $0x40] sm:$0x7]
          %v1500 = vld [vmem:[%s168 + $0x44] sm:$0x7]
          %v1501 = vld [vmem:[%s168 + $0x48] sm:$0x7]
          %v1502 = vld [vmem:[%s168 + $0x4c] sm:$0x7]
          %v1503 = vld [vmem:[%s168 + $0x50] sm:$0x7]
          %v1504 = vld [vmem:[%s168 + $0x54] sm:$0x7]
          %v1505 = vld [vmem:[%s168 + $0x58] sm:$0x7]
          %v1506 = vld [vmem:[%s168 + $0x5c] sm:$0x7]
          %v1507 = vld [vmem:[%s168 + $0x60] sm:$0x7]
          %v1508 = vld [vmem:[%s168 + $0x64] sm:$0x7]
          %v1509 = vld [vmem:[%s168 + $0x68] sm:$0x7]
          %v1510 = vld [vmem:[%s168 + $0x6c] sm:$0x7]
          %v1511 = vld [vmem:[%s168 + $0x70] sm:$0x7]
          %v1512 = vld [vmem:[%s168 + $0x74] sm:$0x7]
          %v1513 = vld [vmem:[%s168 + $0x78] sm:$0x7]
          %v1514 = vld [vmem:[%s168 + $0x7c] sm:$0x7]
          %v1515 = vld [vmem:[%s168 + $0x80] sm:$0x7]
          %v1516 = vld [vmem:[%s168 + $0x84] sm:$0x7]
          %v1517 = vld [vmem:[%s168 + $0x88] sm:$0x7]
          %v1518 = vld [vmem:[%s168 + $0x8c] sm:$0x7]
          %v1519 = vld [vmem:[%s168 + $0x90] sm:$0x7]
          %v1520 = vld [vmem:[%s168 + $0x94] sm:$0x7]
          %v1521 = vld [vmem:[%s168 + $0x98] sm:$0x7]
          %v1522 = vld [vmem:[%s168 + $0x9c] sm:$0x7]
          %v1523 = vld [vmem:[%s168 + $0xa0] sm:$0x7]
          %v1524 = vld [vmem:[%s168 + $0xa4] sm:$0x7]
          %v1525 = vld [vmem:[%s168 + $0xa8] sm:$0x7]
          %v1526 = vld [vmem:[%s168 + $0xac] sm:$0x7]
          %v1527 = vld [vmem:[%s168 + $0xb0] sm:$0x7]
          %v1528 = vld [vmem:[%s168 + $0xb4] sm:$0x7]
          %v1529 = vld [vmem:[%s168 + $0xb8] sm:$0x7]
          %v1530 = vld [vmem:[%s168 + $0xbc] sm:$0x7]
          %v1531 = vld [vmem:[%s168 + $0xc0] sm:$0x7]
          %v1532 = vld [vmem:[%s168 + $0xc4] sm:$0x7]
          %v1533 = vld [vmem:[%s168 + $0xc8] sm:$0x7]
          %v1534 = vld [vmem:[%s168 + $0xcc] sm:$0x7]
          %v1535 = vld [vmem:[%s168 + $0xd0] sm:$0x7]
          %v1536 = vld [vmem:[%s168 + $0xd4] sm:$0x7]
          %v1537 = vld [vmem:[%s168 + $0xd8] sm:$0x7]
          %v1538 = vld [vmem:[%s168 + $0xdc] sm:$0x7]
          %v1539 = vld [vmem:[%s168 + $0xe0] sm:$0x7]
          %v1540 = vld [vmem:[%s168 + $0xe4] sm:$0x7]
          %v1541 = vld [vmem:[%s168 + $0xe8] sm:$0x7]
          %v1542 = vld [vmem:[%s168 + $0xec] sm:$0x7]
          %v1543 = vld [vmem:[%s168 + $0xf0] sm:$0x7]
          %v1544 = vld [vmem:[%s168 + $0xf4] sm:$0x7]
          %v1545 = vld [vmem:[%s168 + $0xf8] sm:$0x7]
          %v1546 = vld [vmem:[%s168 + $0xfc] sm:$0x7]
          %v1547 = vld [vmem:[#allocation3] sm:$0x1]
          %v1549 = vlaneseq
          %v1550 = vshrl.u32 %v1549, 7
          %v1551 = vsub.s32 0, %v1550
          %v1552 = vrot.slane %v1547, %v1551
          %v1554 = vmul.f32 %v1483, %v1552
          %v1555 = vmul.f32 %v1484, %v1552
          %v1556 = vmul.f32 %v1485, %v1552
          %v1557 = vmul.f32 %v1486, %v1552
          %v1558 = vmul.f32 %v1487, %v1552
          %v1559 = vmul.f32 %v1488, %v1552
          %v1560 = vmul.f32 %v1489, %v1552
          %v1561 = vmul.f32 %v1490, %v1552
          %v1562 = vmul.f32 %v1491, %v1552
          %v1563 = vmul.f32 %v1492, %v1552
          %v1564 = vmul.f32 %v1493, %v1552
          %v1565 = vmul.f32 %v1494, %v1552
          %v1566 = vmul.f32 %v1495, %v1552
          %v1567 = vmul.f32 %v1496, %v1552
          %v1568 = vmul.f32 %v1497, %v1552
          %v1569 = vmul.f32 %v1498, %v1552
          %v1570 = vmul.f32 %v1499, %v1552
          %v1571 = vmul.f32 %v1500, %v1552
          %v1572 = vmul.f32 %v1501, %v1552
          %v1573 = vmul.f32 %v1502, %v1552
          %v1574 = vmul.f32 %v1503, %v1552
          %v1575 = vmul.f32 %v1504, %v1552
          %v1576 = vmul.f32 %v1505, %v1552
          %v1577 = vmul.f32 %v1506, %v1552
          %v1578 = vmul.f32 %v1507, %v1552
          %v1579 = vmul.f32 %v1508, %v1552
          %v1580 = vmul.f32 %v1509, %v1552
          %v1581 = vmul.f32 %v1510, %v1552
          %v1582 = vmul.f32 %v1511, %v1552
          %v1583 = vmul.f32 %v1512, %v1552
          %v1584 = vmul.f32 %v1513, %v1552
          %v1585 = vmul.f32 %v1514, %v1552
          %v1586 = vmul.f32 %v1515, %v1552
          %v1587 = vmul.f32 %v1516, %v1552
          %v1588 = vmul.f32 %v1517, %v1552
          %v1589 = vmul.f32 %v1518, %v1552
          %v1590 = vmul.f32 %v1519, %v1552
          %v1591 = vmul.f32 %v1520, %v1552
          %v1592 = vmul.f32 %v1521, %v1552
          %v1593 = vmul.f32 %v1522, %v1552
          %v1594 = vmul.f32 %v1523, %v1552
          %v1595 = vmul.f32 %v1524, %v1552
          %v1596 = vmul.f32 %v1525, %v1552
          %v1597 = vmul.f32 %v1526, %v1552
          %v1598 = vmul.f32 %v1527, %v1552
          %v1599 = vmul.f32 %v1528, %v1552
          %v1600 = vmul.f32 %v1529, %v1552
          %v1601 = vmul.f32 %v1530, %v1552
          %v1602 = vmul.f32 %v1531, %v1552
          %v1603 = vmul.f32 %v1532, %v1552
          %v1604 = vmul.f32 %v1533, %v1552
          %v1605 = vmul.f32 %v1534, %v1552
          %v1606 = vmul.f32 %v1535, %v1552
          %v1607 = vmul.f32 %v1536, %v1552
          %v1608 = vmul.f32 %v1537, %v1552
          %v1609 = vmul.f32 %v1538, %v1552
          %v1610 = vmul.f32 %v1539, %v1552
          %v1611 = vmul.f32 %v1540, %v1552
          %v1612 = vmul.f32 %v1541, %v1552
          %v1613 = vmul.f32 %v1542, %v1552
          %v1614 = vmul.f32 %v1543, %v1552
          %v1615 = vmul.f32 %v1544, %v1552
          %v1616 = vmul.f32 %v1545, %v1552
          %v1617 = vmul.f32 %v1546, %v1552
          %vm1618 = vcmask 256000
          %1619 = vst.msk [vmem:[%s159] sm:$0x7] %vm1618, %v1554
          %1620 = vst.msk [vmem:[%s159 + $0x4] sm:$0x7] %vm1618, %v1555
          %1621 = vst.msk [vmem:[%s159 + $0x8] sm:$0x7] %vm1618, %v1556
          %1622 = vst.msk [vmem:[%s159 + $0xc] sm:$0x7] %vm1618, %v1557
          %1623 = vst.msk [vmem:[%s159 + $0x10] sm:$0x7] %vm1618, %v1558
          %1624 = vst.msk [vmem:[%s159 + $0x14] sm:$0x7] %vm1618, %v1559
          %1625 = vst.msk [vmem:[%s159 + $0x18] sm:$0x7] %vm1618, %v1560
          %1626 = vst.msk [vmem:[%s159 + $0x1c] sm:$0x7] %vm1618, %v1561
          %1627 = vst.msk [vmem:[%s159 + $0x20] sm:$0x7] %vm1618, %v1562
          %1628 = vst.msk [vmem:[%s159 + $0x24] sm:$0x7] %vm1618, %v1563
          %1629 = vst.msk [vmem:[%s159 + $0x28] sm:$0x7] %vm1618, %v1564
          %1630 = vst.msk [vmem:[%s159 + $0x2c] sm:$0x7] %vm1618, %v1565
          %1631 = vst.msk [vmem:[%s159 + $0x30] sm:$0x7] %vm1618, %v1566
          %1632 = vst.msk [vmem:[%s159 + $0x34] sm:$0x7] %vm1618, %v1567
          %1633 = vst.msk [vmem:[%s159 + $0x38] sm:$0x7] %vm1618, %v1568
          %1634 = vst.msk [vmem:[%s159 + $0x3c] sm:$0x7] %vm1618, %v1569
          %1635 = vst.msk [vmem:[%s159 + $0x40] sm:$0x7] %vm1618, %v1570
          %1636 = vst.msk [vmem:[%s159 + $0x44] sm:$0x7] %vm1618, %v1571
          %1637 = vst.msk [vmem:[%s159 + $0x48] sm:$0x7] %vm1618, %v1572
          %1638 = vst.msk [vmem:[%s159 + $0x4c] sm:$0x7] %vm1618, %v1573
          %1639 = vst.msk [vmem:[%s159 + $0x50] sm:$0x7] %vm1618, %v1574
          %1640 = vst.msk [vmem:[%s159 + $0x54] sm:$0x7] %vm1618, %v1575
          %1641 = vst.msk [vmem:[%s159 + $0x58] sm:$0x7] %vm1618, %v1576
          %1642 = vst.msk [vmem:[%s159 + $0x5c] sm:$0x7] %vm1618, %v1577
          %1643 = vst.msk [vmem:[%s159 + $0x60] sm:$0x7] %vm1618, %v1578
          %1644 = vst.msk [vmem:[%s159 + $0x64] sm:$0x7] %vm1618, %v1579
          %1645 = vst.msk [vmem:[%s159 + $0x68] sm:$0x7] %vm1618, %v1580
          %1646 = vst.msk [vmem:[%s159 + $0x6c] sm:$0x7] %vm1618, %v1581
          %1647 = vst.msk [vmem:[%s159 + $0x70] sm:$0x7] %vm1618, %v1582
          %1648 = vst.msk [vmem:[%s159 + $0x74] sm:$0x7] %vm1618, %v1583
          %1649 = vst.msk [vmem:[%s159 + $0x78] sm:$0x7] %vm1618, %v1584
          %1650 = vst.msk [vmem:[%s159 + $0x7c] sm:$0x7] %vm1618, %v1585
          %1651 = vst.msk [vmem:[%s159 + $0x80] sm:$0x7] %vm1618, %v1586
          %1652 = vst.msk [vmem:[%s159 + $0x84] sm:$0x7] %vm1618, %v1587
          %1653 = vst.msk [vmem:[%s159 + $0x88] sm:$0x7] %vm1618, %v1588
          %1654 = vst.msk [vmem:[%s159 + $0x8c] sm:$0x7] %vm1618, %v1589
          %1655 = vst.msk [vmem:[%s159 + $0x90] sm:$0x7] %vm1618, %v1590
          %1656 = vst.msk [vmem:[%s159 + $0x94] sm:$0x7] %vm1618, %v1591
          %1657 = vst.msk [vmem:[%s159 + $0x98] sm:$0x7] %vm1618, %v1592
          %1658 = vst.msk [vmem:[%s159 + $0x9c] sm:$0x7] %vm1618, %v1593
          %1659 = vst.msk [vmem:[%s159 + $0xa0] sm:$0x7] %vm1618, %v1594
          %1660 = vst.msk [vmem:[%s159 + $0xa4] sm:$0x7] %vm1618, %v1595
          %1661 = vst.msk [vmem:[%s159 + $0xa8] sm:$0x7] %vm1618, %v1596
          %1662 = vst.msk [vmem:[%s159 + $0xac] sm:$0x7] %vm1618, %v1597
          %1663 = vst.msk [vmem:[%s159 + $0xb0] sm:$0x7] %vm1618, %v1598
          %1664 = vst.msk [vmem:[%s159 + $0xb4] sm:$0x7] %vm1618, %v1599
          %1665 = vst.msk [vmem:[%s159 + $0xb8] sm:$0x7] %vm1618, %v1600
          %1666 = vst.msk [vmem:[%s159 + $0xbc] sm:$0x7] %vm1618, %v1601
          %1667 = vst.msk [vmem:[%s159 + $0xc0] sm:$0x7] %vm1618, %v1602
          %1668 = vst.msk [vmem:[%s159 + $0xc4] sm:$0x7] %vm1618, %v1603
          %1669 = vst.msk [vmem:[%s159 + $0xc8] sm:$0x7] %vm1618, %v1604
          %1670 = vst.msk [vmem:[%s159 + $0xcc] sm:$0x7] %vm1618, %v1605
          %1671 = vst.msk [vmem:[%s159 + $0xd0] sm:$0x7] %vm1618, %v1606
          %1672 = vst.msk [vmem:[%s159 + $0xd4] sm:$0x7] %vm1618, %v1607
          %1673 = vst.msk [vmem:[%s159 + $0xd8] sm:$0x7] %vm1618, %v1608
          %1674 = vst.msk [vmem:[%s159 + $0xdc] sm:$0x7] %vm1618, %v1609
          %1675 = vst.msk [vmem:[%s159 + $0xe0] sm:$0x7] %vm1618, %v1610
          %1676 = vst.msk [vmem:[%s159 + $0xe4] sm:$0x7] %vm1618, %v1611
          %1677 = vst.msk [vmem:[%s159 + $0xe8] sm:$0x7] %vm1618, %v1612
          %1678 = vst.msk [vmem:[%s159 + $0xec] sm:$0x7] %vm1618, %v1613
          %1679 = vst.msk [vmem:[%s159 + $0xf0] sm:$0x7] %vm1618, %v1614
          %1680 = vst.msk [vmem:[%s159 + $0xf4] sm:$0x7] %vm1618, %v1615
          %1681 = vst.msk [vmem:[%s159 + $0xf8] sm:$0x7] %vm1618, %v1616
          %1682 = vst.msk [vmem:[%s159 + $0xfc] sm:$0x7] %vm1618, %v1617
        $region44: #{tpu_custom_call.1} parent=27 // pred_fallthru
          _
        %s1683 = sand.u32 %s82, 1
        %s1684 = sand.u32 %s82, 1
        %s1685 = smul.addr %s1684, 256
        %s1686 = scalar_lea.vmem [#allocation4], %s1685
        // Predicated region
        $region45: #{tpu_custom_call.1} parent=27 // pred_check
          %p1687 = pneg %p92
        $region46: #{tpu_custom_call.1} parent=27 // pred_check_branch
          %1689 = sbr.rel (%p1687) target = $region48
        $region47: #{tpu_custom_call.1} parent=27 // pred_region
          %s1690 = smul.u32 %s18, %s17
          %s1691 = smul.u32 64, %s1690
          %s1692 = ssub.s32 300, %s1691
          %p1693 = scmp.lt.s32.totalorder %s1692, 64
          %s1694 = scalar_select %p1693, %s1692, 64
          %s1695 = smul.u32 64, %s1694
          %p1696 = scmp.ne.s32.totalorder 0, %s1695
          %s1697 = smul.addr %s1691, 4
          %s1698 = scalar_lea.vmem %s2, %s1697
          // Predicated region
          $region49: #{tpu_custom_call.1} parent=47 // pred_check
            %p1699 = pneg %p1696
          $region50: #{tpu_custom_call.1} parent=47 // pred_check_branch
            %1701 = sbr.rel (%p1699) target = $region52
          $region51: #{tpu_custom_call.1} parent=47 // pred_region
            // Predicated region
            $region53: #{tpu_custom_call.1} parent=51 // pred_check
              _
            $region54: #{tpu_custom_call.1} parent=51 // pred_check_branch
              %1703 = sbr.rel target = $region56
            $region55: #{tpu_custom_call.1} parent=51 // pred_region
              // Predicated region
              $region75: #{tpu_custom_call.1} parent=55 // pred_check
                _
              $region76: #{tpu_custom_call.1} parent=55 // pred_check_branch
                %1879 = sbr.rel (0) target = $region78
              $region77: #{tpu_custom_call.1} parent=55 // pred_region
                %s1881 = ssub.s32 16, 1
                %s1882 = sshrl.u32 %s1694, 6
                // While loop
                $region79: #{tpu_custom_call.1} parent=77 // loop_pre_header
                  _
                $region80: #{tpu_custom_call.1} parent=77 // loop_header
                  %s1884 = sphi 0, %s1886
                  %p1885 = scmp.ge.s32.totalorder %s1884, %s1882
                  %s1889 = sphi 0, %s2022
                  %s1890 = sphi %s1686, %s2025
                  %s1891 = sphi %s1698, %s2026
                $region81: #{tpu_custom_call.1} parent=77 // loop_header_branch
                  %1888 = sbr.rel (%p1885) target = $region85
                $region82: #{tpu_custom_call.1} parent=77 // loop_body
                  %v1892 = vld [vmem:[%s1890] sm:%s1881]
                  %1893 = vst [vmem:[%s1891] sm:%s1881] %v1892
                  %v1894 = vld [vmem:[%s1890 + $0x4] sm:%s1881]
                  %1895 = vst [vmem:[%s1891 + $0x4] sm:%s1881] %v1894
                  %v1896 = vld [vmem:[%s1890 + $0x8] sm:%s1881]
                  %1897 = vst [vmem:[%s1891 + $0x8] sm:%s1881] %v1896
                  %v1898 = vld [vmem:[%s1890 + $0xc] sm:%s1881]
                  %1899 = vst [vmem:[%s1891 + $0xc] sm:%s1881] %v1898
                  %v1900 = vld [vmem:[%s1890 + $0x10] sm:%s1881]
                  %1901 = vst [vmem:[%s1891 + $0x10] sm:%s1881] %v1900
                  %v1902 = vld [vmem:[%s1890 + $0x14] sm:%s1881]
                  %1903 = vst [vmem:[%s1891 + $0x14] sm:%s1881] %v1902
                  %v1904 = vld [vmem:[%s1890 + $0x18] sm:%s1881]
                  %1905 = vst [vmem:[%s1891 + $0x18] sm:%s1881] %v1904
                  %v1906 = vld [vmem:[%s1890 + $0x1c] sm:%s1881]
                  %1907 = vst [vmem:[%s1891 + $0x1c] sm:%s1881] %v1906
                  %v1908 = vld [vmem:[%s1890 + $0x20] sm:%s1881]
                  %1909 = vst [vmem:[%s1891 + $0x20] sm:%s1881] %v1908
                  %v1910 = vld [vmem:[%s1890 + $0x24] sm:%s1881]
                  %1911 = vst [vmem:[%s1891 + $0x24] sm:%s1881] %v1910
                  %v1912 = vld [vmem:[%s1890 + $0x28] sm:%s1881]
                  %1913 = vst [vmem:[%s1891 + $0x28] sm:%s1881] %v1912
                  %v1914 = vld [vmem:[%s1890 + $0x2c] sm:%s1881]
                  %1915 = vst [vmem:[%s1891 + $0x2c] sm:%s1881] %v1914
                  %v1916 = vld [vmem:[%s1890 + $0x30] sm:%s1881]
                  %1917 = vst [vmem:[%s1891 + $0x30] sm:%s1881] %v1916
                  %v1918 = vld [vmem:[%s1890 + $0x34] sm:%s1881]
                  %1919 = vst [vmem:[%s1891 + $0x34] sm:%s1881] %v1918
                  %v1920 = vld [vmem:[%s1890 + $0x38] sm:%s1881]
                  %1921 = vst [vmem:[%s1891 + $0x38] sm:%s1881] %v1920
                  %v1922 = vld [vmem:[%s1890 + $0x3c] sm:%s1881]
                  %1923 = vst [vmem:[%s1891 + $0x3c] sm:%s1881] %v1922
                  %v1924 = vld [vmem:[%s1890 + $0x40] sm:%s1881]
                  %1925 = vst [vmem:[%s1891 + $0x40] sm:%s1881] %v1924
                  %v1926 = vld [vmem:[%s1890 + $0x44] sm:%s1881]
                  %1927 = vst [vmem:[%s1891 + $0x44] sm:%s1881] %v1926
                  %v1928 = vld [vmem:[%s1890 + $0x48] sm:%s1881]
                  %1929 = vst [vmem:[%s1891 + $0x48] sm:%s1881] %v1928
                  %v1930 = vld [vmem:[%s1890 + $0x4c] sm:%s1881]
                  %1931 = vst [vmem:[%s1891 + $0x4c] sm:%s1881] %v1930
                  %v1932 = vld [vmem:[%s1890 + $0x50] sm:%s1881]
                  %1933 = vst [vmem:[%s1891 + $0x50] sm:%s1881] %v1932
                  %v1934 = vld [vmem:[%s1890 + $0x54] sm:%s1881]
                  %1935 = vst [vmem:[%s1891 + $0x54] sm:%s1881] %v1934
                  %v1936 = vld [vmem:[%s1890 + $0x58] sm:%s1881]
                  %1937 = vst [vmem:[%s1891 + $0x58] sm:%s1881] %v1936
                  %v1938 = vld [vmem:[%s1890 + $0x5c] sm:%s1881]
                  %1939 = vst [vmem:[%s1891 + $0x5c] sm:%s1881] %v1938
                  %v1940 = vld [vmem:[%s1890 + $0x60] sm:%s1881]
                  %1941 = vst [vmem:[%s1891 + $0x60] sm:%s1881] %v1940
                  %v1942 = vld [vmem:[%s1890 + $0x64] sm:%s1881]
                  %1943 = vst [vmem:[%s1891 + $0x64] sm:%s1881] %v1942
                  %v1944 = vld [vmem:[%s1890 + $0x68] sm:%s1881]
                  %1945 = vst [vmem:[%s1891 + $0x68] sm:%s1881] %v1944
                  %v1946 = vld [vmem:[%s1890 + $0x6c] sm:%s1881]
                  %1947 = vst [vmem:[%s1891 + $0x6c] sm:%s1881] %v1946
                  %v1948 = vld [vmem:[%s1890 + $0x70] sm:%s1881]
                  %1949 = vst [vmem:[%s1891 + $0x70] sm:%s1881] %v1948
                  %v1950 = vld [vmem:[%s1890 + $0x74] sm:%s1881]
                  %1951 = vst [vmem:[%s1891 + $0x74] sm:%s1881] %v1950
                  %v1952 = vld [vmem:[%s1890 + $0x78] sm:%s1881]
                  %1953 = vst [vmem:[%s1891 + $0x78] sm:%s1881] %v1952
                  %v1954 = vld [vmem:[%s1890 + $0x7c] sm:%s1881]
                  %1955 = vst [vmem:[%s1891 + $0x7c] sm:%s1881] %v1954
                  %v1956 = vld [vmem:[%s1890 + $0x80] sm:%s1881]
                  %1957 = vst [vmem:[%s1891 + $0x80] sm:%s1881] %v1956
                  %v1958 = vld [vmem:[%s1890 + $0x84] sm:%s1881]
                  %1959 = vst [vmem:[%s1891 + $0x84] sm:%s1881] %v1958
                  %v1960 = vld [vmem:[%s1890 + $0x88] sm:%s1881]
                  %1961 = vst [vmem:[%s1891 + $0x88] sm:%s1881] %v1960
                  %v1962 = vld [vmem:[%s1890 + $0x8c] sm:%s1881]
                  %1963 = vst [vmem:[%s1891 + $0x8c] sm:%s1881] %v1962
                  %v1964 = vld [vmem:[%s1890 + $0x90] sm:%s1881]
                  %1965 = vst [vmem:[%s1891 + $0x90] sm:%s1881] %v1964
                  %v1966 = vld [vmem:[%s1890 + $0x94] sm:%s1881]
                  %1967 = vst [vmem:[%s1891 + $0x94] sm:%s1881] %v1966
                  %v1968 = vld [vmem:[%s1890 + $0x98] sm:%s1881]
                  %1969 = vst [vmem:[%s1891 + $0x98] sm:%s1881] %v1968
                  %v1970 = vld [vmem:[%s1890 + $0x9c] sm:%s1881]
                  %1971 = vst [vmem:[%s1891 + $0x9c] sm:%s1881] %v1970
                  %v1972 = vld [vmem:[%s1890 + $0xa0] sm:%s1881]
                  %1973 = vst [vmem:[%s1891 + $0xa0] sm:%s1881] %v1972
                  %v1974 = vld [vmem:[%s1890 + $0xa4] sm:%s1881]
                  %1975 = vst [vmem:[%s1891 + $0xa4] sm:%s1881] %v1974
                  %v1976 = vld [vmem:[%s1890 + $0xa8] sm:%s1881]
                  %1977 = vst [vmem:[%s1891 + $0xa8] sm:%s1881] %v1976
                  %v1978 = vld [vmem:[%s1890 + $0xac] sm:%s1881]
                  %1979 = vst [vmem:[%s1891 + $0xac] sm:%s1881] %v1978
                  %v1980 = vld [vmem:[%s1890 + $0xb0] sm:%s1881]
                  %1981 = vst [vmem:[%s1891 + $0xb0] sm:%s1881] %v1980
                  %v1982 = vld [vmem:[%s1890 + $0xb4] sm:%s1881]
                  %1983 = vst [vmem:[%s1891 + $0xb4] sm:%s1881] %v1982
                  %v1984 = vld [vmem:[%s1890 + $0xb8] sm:%s1881]
                  %1985 = vst [vmem:[%s1891 + $0xb8] sm:%s1881] %v1984
                  %v1986 = vld [vmem:[%s1890 + $0xbc] sm:%s1881]
                  %1987 = vst [vmem:[%s1891 + $0xbc] sm:%s1881] %v1986
                  %v1988 = vld [vmem:[%s1890 + $0xc0] sm:%s1881]
                  %1989 = vst [vmem:[%s1891 + $0xc0] sm:%s1881] %v1988
                  %v1990 = vld [vmem:[%s1890 + $0xc4] sm:%s1881]
                  %1991 = vst [vmem:[%s1891 + $0xc4] sm:%s1881] %v1990
                  %v1992 = vld [vmem:[%s1890 + $0xc8] sm:%s1881]
                  %1993 = vst [vmem:[%s1891 + $0xc8] sm:%s1881] %v1992
                  %v1994 = vld [vmem:[%s1890 + $0xcc] sm:%s1881]
                  %1995 = vst [vmem:[%s1891 + $0xcc] sm:%s1881] %v1994
                  %v1996 = vld [vmem:[%s1890 + $0xd0] sm:%s1881]
                  %1997 = vst [vmem:[%s1891 + $0xd0] sm:%s1881] %v1996
                  %v1998 = vld [vmem:[%s1890 + $0xd4] sm:%s1881]
                  %1999 = vst [vmem:[%s1891 + $0xd4] sm:%s1881] %v1998
                  %v2000 = vld [vmem:[%s1890 + $0xd8] sm:%s1881]
                  %2001 = vst [vmem:[%s1891 + $0xd8] sm:%s1881] %v2000
                  %v2002 = vld [vmem:[%s1890 + $0xdc] sm:%s1881]
                  %2003 = vst [vmem:[%s1891 + $0xdc] sm:%s1881] %v2002
                  %v2004 = vld [vmem:[%s1890 + $0xe0] sm:%s1881]
                  %2005 = vst [vmem:[%s1891 + $0xe0] sm:%s1881] %v2004
                  %v2006 = vld [vmem:[%s1890 + $0xe4] sm:%s1881]
                  %2007 = vst [vmem:[%s1891 + $0xe4] sm:%s1881] %v2006
                  %v2008 = vld [vmem:[%s1890 + $0xe8] sm:%s1881]
                  %2009 = vst [vmem:[%s1891 + $0xe8] sm:%s1881] %v2008
                  %v2010 = vld [vmem:[%s1890 + $0xec] sm:%s1881]
                  %2011 = vst [vmem:[%s1891 + $0xec] sm:%s1881] %v2010
                  %v2012 = vld [vmem:[%s1890 + $0xf0] sm:%s1881]
                  %2013 = vst [vmem:[%s1891 + $0xf0] sm:%s1881] %v2012
                  %v2014 = vld [vmem:[%s1890 + $0xf4] sm:%s1881]
                  %2015 = vst [vmem:[%s1891 + $0xf4] sm:%s1881] %v2014
                  %v2016 = vld [vmem:[%s1890 + $0xf8] sm:%s1881]
                  %2017 = vst [vmem:[%s1891 + $0xf8] sm:%s1881] %v2016
                  %v2018 = vld [vmem:[%s1890 + $0xfc] sm:%s1881]
                  %2019 = vst [vmem:[%s1891 + $0xfc] sm:%s1881] %v2018
                  %s2020 = sadd.s32 1, %s1889
                  %p2021 = scmp.ge.s32.totalorder %s2020, %s1882
                  %s2022 = scalar_select %p2021, 0, %s2020
                  %s2023 = smul.u32 %s2022, 256
                  %s2024 = smul.u32 %s2022, 256
                  %s2025 = scalar_lea.vmem %s1686, %s2023 [#allocation4]
                  %s2026 = scalar_lea.vmem %s1698, %s2024
                $region83: #{tpu_custom_call.1} parent=77 // loop_footer
                  %s1886 = sadd.s32 %s1884, 1
                $region84: #{tpu_custom_call.1} parent=77 // loop_footer_branch
                  %1883 = sbr.rel target = $region80
                $region85: #{tpu_custom_call.1} parent=77 // loop_exit
                  _
                %s2027 = sshrl.u32 %s1694, 6
                %s2028 = sand.u32 %s1694, 63
                %s2029 = smul.u32 %s2027, 64
                %s2030 = smul.u32 4, %s2029
                %s2031 = scalar_lea.vmem %s1686, %s2030 [#allocation4]
                %s2032 = smul.u32 4, %s2029
                %s2033 = scalar_lea.vmem %s1698, %s2032
                // While loop
                $region86: #{tpu_custom_call.1} parent=77 // loop_pre_header
                  _
                $region87: #{tpu_custom_call.1} parent=77 // loop_header
                  %s2035 = sphi 0, %s2037
                  %p2036 = scmp.ge.s32.totalorder %s2035, %s2028
                  %s2040 = sphi 0, %s2047
                  %s2041 = sphi %s2031, %s2050
                  %s2042 = sphi %s2033, %s2051
                $region88: #{tpu_custom_call.1} parent=77 // loop_header_branch
                  %2039 = sbr.rel (%p2036) target = $region92
                $region89: #{tpu_custom_call.1} parent=77 // loop_body
                  %v2043 = vld [vmem:[%s2041] sm:%s1881]
                  %2044 = vst [vmem:[%s2042] sm:%s1881] %v2043
                  %s2045 = sadd.s32 1, %s2040
                  %p2046 = scmp.ge.s32.totalorder %s2045, %s2028
                  %s2047 = scalar_select %p2046, 0, %s2045
                  %s2048 = smul.u32 %s2047, 4
                  %s2049 = smul.u32 %s2047, 4
                  %s2050 = scalar_lea.vmem %s2031, %s2048 [#allocation4]
                  %s2051 = scalar_lea.vmem %s2033, %s2049
                $region90: #{tpu_custom_call.1} parent=77 // loop_footer
                  %s2037 = sadd.s32 %s2035, 1
                $region91: #{tpu_custom_call.1} parent=77 // loop_footer_branch
                  %2034 = sbr.rel target = $region87
                $region92: #{tpu_custom_call.1} parent=77 // loop_exit
                  _
              $region78: #{tpu_custom_call.1} parent=55 // pred_fallthru
                _
            $region56: #{tpu_custom_call.1} parent=51 // pred_fallthru
              _
            // Predicated region
            $region57: #{tpu_custom_call.1} parent=51 // pred_check
              _
            $region58: #{tpu_custom_call.1} parent=51 // pred_check_branch
              %1705 = sbr.rel (0) target = $region60
            $region59: #{tpu_custom_call.1} parent=51 // pred_region
              %s1707 = ssub.s32 16, 1
              %s1708 = sshrl.u32 %s1694, 6
              // While loop
              $region61: #{tpu_custom_call.1} parent=59 // loop_pre_header
                _
              $region62: #{tpu_custom_call.1} parent=59 // loop_header
                %s1710 = sphi 0, %s1712
                %p1711 = scmp.ge.s32.totalorder %s1710, %s1708
                %s1715 = sphi 0, %s1848
                %s1716 = sphi %s1686, %s1851
                %s1717 = sphi %s1698, %s1852
              $region63: #{tpu_custom_call.1} parent=59 // loop_header_branch
                %1714 = sbr.rel (%p1711) target = $region67
              $region64: #{tpu_custom_call.1} parent=59 // loop_body
                %v1718 = vld [vmem:[%s1716] sm:%s1707]
                %1719 = vst [vmem:[%s1717] sm:%s1707] %v1718
                %v1720 = vld [vmem:[%s1716 + $0x4] sm:%s1707]
                %1721 = vst [vmem:[%s1717 + $0x4] sm:%s1707] %v1720
                %v1722 = vld [vmem:[%s1716 + $0x8] sm:%s1707]
                %1723 = vst [vmem:[%s1717 + $0x8] sm:%s1707] %v1722
                %v1724 = vld [vmem:[%s1716 + $0xc] sm:%s1707]
                %1725 = vst [vmem:[%s1717 + $0xc] sm:%s1707] %v1724
                %v1726 = vld [vmem:[%s1716 + $0x10] sm:%s1707]
                %1727 = vst [vmem:[%s1717 + $0x10] sm:%s1707] %v1726
                %v1728 = vld [vmem:[%s1716 + $0x14] sm:%s1707]
                %1729 = vst [vmem:[%s1717 + $0x14] sm:%s1707] %v1728
                %v1730 = vld [vmem:[%s1716 + $0x18] sm:%s1707]
                %1731 = vst [vmem:[%s1717 + $0x18] sm:%s1707] %v1730
                %v1732 = vld [vmem:[%s1716 + $0x1c] sm:%s1707]
                %1733 = vst [vmem:[%s1717 + $0x1c] sm:%s1707] %v1732
                %v1734 = vld [vmem:[%s1716 + $0x20] sm:%s1707]
                %1735 = vst [vmem:[%s1717 + $0x20] sm:%s1707] %v1734
                %v1736 = vld [vmem:[%s1716 + $0x24] sm:%s1707]
                %1737 = vst [vmem:[%s1717 + $0x24] sm:%s1707] %v1736
                %v1738 = vld [vmem:[%s1716 + $0x28] sm:%s1707]
                %1739 = vst [vmem:[%s1717 + $0x28] sm:%s1707] %v1738
                %v1740 = vld [vmem:[%s1716 + $0x2c] sm:%s1707]
                %1741 = vst [vmem:[%s1717 + $0x2c] sm:%s1707] %v1740
                %v1742 = vld [vmem:[%s1716 + $0x30] sm:%s1707]
                %1743 = vst [vmem:[%s1717 + $0x30] sm:%s1707] %v1742
                %v1744 = vld [vmem:[%s1716 + $0x34] sm:%s1707]
                %1745 = vst [vmem:[%s1717 + $0x34] sm:%s1707] %v1744
                %v1746 = vld [vmem:[%s1716 + $0x38] sm:%s1707]
                %1747 = vst [vmem:[%s1717 + $0x38] sm:%s1707] %v1746
                %v1748 = vld [vmem:[%s1716 + $0x3c] sm:%s1707]
                %1749 = vst [vmem:[%s1717 + $0x3c] sm:%s1707] %v1748
                %v1750 = vld [vmem:[%s1716 + $0x40] sm:%s1707]
                %1751 = vst [vmem:[%s1717 + $0x40] sm:%s1707] %v1750
                %v1752 = vld [vmem:[%s1716 + $0x44] sm:%s1707]
                %1753 = vst [vmem:[%s1717 + $0x44] sm:%s1707] %v1752
                %v1754 = vld [vmem:[%s1716 + $0x48] sm:%s1707]
                %1755 = vst [vmem:[%s1717 + $0x48] sm:%s1707] %v1754
                %v1756 = vld [vmem:[%s1716 + $0x4c] sm:%s1707]
                %1757 = vst [vmem:[%s1717 + $0x4c] sm:%s1707] %v1756
                %v1758 = vld [vmem:[%s1716 + $0x50] sm:%s1707]
                %1759 = vst [vmem:[%s1717 + $0x50] sm:%s1707] %v1758
                %v1760 = vld [vmem:[%s1716 + $0x54] sm:%s1707]
                %1761 = vst [vmem:[%s1717 + $0x54] sm:%s1707] %v1760
                %v1762 = vld [vmem:[%s1716 + $0x58] sm:%s1707]
                %1763 = vst [vmem:[%s1717 + $0x58] sm:%s1707] %v1762
                %v1764 = vld [vmem:[%s1716 + $0x5c] sm:%s1707]
                %1765 = vst [vmem:[%s1717 + $0x5c] sm:%s1707] %v1764
                %v1766 = vld [vmem:[%s1716 + $0x60] sm:%s1707]
                %1767 = vst [vmem:[%s1717 + $0x60] sm:%s1707] %v1766
                %v1768 = vld [vmem:[%s1716 + $0x64] sm:%s1707]
                %1769 = vst [vmem:[%s1717 + $0x64] sm:%s1707] %v1768
                %v1770 = vld [vmem:[%s1716 + $0x68] sm:%s1707]
                %1771 = vst [vmem:[%s1717 + $0x68] sm:%s1707] %v1770
                %v1772 = vld [vmem:[%s1716 + $0x6c] sm:%s1707]
                %1773 = vst [vmem:[%s1717 + $0x6c] sm:%s1707] %v1772
                %v1774 = vld [vmem:[%s1716 + $0x70] sm:%s1707]
                %1775 = vst [vmem:[%s1717 + $0x70] sm:%s1707] %v1774
                %v1776 = vld [vmem:[%s1716 + $0x74] sm:%s1707]
                %1777 = vst [vmem:[%s1717 + $0x74] sm:%s1707] %v1776
                %v1778 = vld [vmem:[%s1716 + $0x78] sm:%s1707]
                %1779 = vst [vmem:[%s1717 + $0x78] sm:%s1707] %v1778
                %v1780 = vld [vmem:[%s1716 + $0x7c] sm:%s1707]
                %1781 = vst [vmem:[%s1717 + $0x7c] sm:%s1707] %v1780
                %v1782 = vld [vmem:[%s1716 + $0x80] sm:%s1707]
                %1783 = vst [vmem:[%s1717 + $0x80] sm:%s1707] %v1782
                %v1784 = vld [vmem:[%s1716 + $0x84] sm:%s1707]
                %1785 = vst [vmem:[%s1717 + $0x84] sm:%s1707] %v1784
                %v1786 = vld [vmem:[%s1716 + $0x88] sm:%s1707]
                %1787 = vst [vmem:[%s1717 + $0x88] sm:%s1707] %v1786
                %v1788 = vld [vmem:[%s1716 + $0x8c] sm:%s1707]
                %1789 = vst [vmem:[%s1717 + $0x8c] sm:%s1707] %v1788
                %v1790 = vld [vmem:[%s1716 + $0x90] sm:%s1707]
                %1791 = vst [vmem:[%s1717 + $0x90] sm:%s1707] %v1790
                %v1792 = vld [vmem:[%s1716 + $0x94] sm:%s1707]
                %1793 = vst [vmem:[%s1717 + $0x94] sm:%s1707] %v1792
                %v1794 = vld [vmem:[%s1716 + $0x98] sm:%s1707]
                %1795 = vst [vmem:[%s1717 + $0x98] sm:%s1707] %v1794
                %v1796 = vld [vmem:[%s1716 + $0x9c] sm:%s1707]
                %1797 = vst [vmem:[%s1717 + $0x9c] sm:%s1707] %v1796
                %v1798 = vld [vmem:[%s1716 + $0xa0] sm:%s1707]
                %1799 = vst [vmem:[%s1717 + $0xa0] sm:%s1707] %v1798
                %v1800 = vld [vmem:[%s1716 + $0xa4] sm:%s1707]
                %1801 = vst [vmem:[%s1717 + $0xa4] sm:%s1707] %v1800
                %v1802 = vld [vmem:[%s1716 + $0xa8] sm:%s1707]
                %1803 = vst [vmem:[%s1717 + $0xa8] sm:%s1707] %v1802
                %v1804 = vld [vmem:[%s1716 + $0xac] sm:%s1707]
                %1805 = vst [vmem:[%s1717 + $0xac] sm:%s1707] %v1804
                %v1806 = vld [vmem:[%s1716 + $0xb0] sm:%s1707]
                %1807 = vst [vmem:[%s1717 + $0xb0] sm:%s1707] %v1806
                %v1808 = vld [vmem:[%s1716 + $0xb4] sm:%s1707]
                %1809 = vst [vmem:[%s1717 + $0xb4] sm:%s1707] %v1808
                %v1810 = vld [vmem:[%s1716 + $0xb8] sm:%s1707]
                %1811 = vst [vmem:[%s1717 + $0xb8] sm:%s1707] %v1810
                %v1812 = vld [vmem:[%s1716 + $0xbc] sm:%s1707]
                %1813 = vst [vmem:[%s1717 + $0xbc] sm:%s1707] %v1812
                %v1814 = vld [vmem:[%s1716 + $0xc0] sm:%s1707]
                %1815 = vst [vmem:[%s1717 + $0xc0] sm:%s1707] %v1814
                %v1816 = vld [vmem:[%s1716 + $0xc4] sm:%s1707]
                %1817 = vst [vmem:[%s1717 + $0xc4] sm:%s1707] %v1816
                %v1818 = vld [vmem:[%s1716 + $0xc8] sm:%s1707]
                %1819 = vst [vmem:[%s1717 + $0xc8] sm:%s1707] %v1818
                %v1820 = vld [vmem:[%s1716 + $0xcc] sm:%s1707]
                %1821 = vst [vmem:[%s1717 + $0xcc] sm:%s1707] %v1820
                %v1822 = vld [vmem:[%s1716 + $0xd0] sm:%s1707]
                %1823 = vst [vmem:[%s1717 + $0xd0] sm:%s1707] %v1822
                %v1824 = vld [vmem:[%s1716 + $0xd4] sm:%s1707]
                %1825 = vst [vmem:[%s1717 + $0xd4] sm:%s1707] %v1824
                %v1826 = vld [vmem:[%s1716 + $0xd8] sm:%s1707]
                %1827 = vst [vmem:[%s1717 + $0xd8] sm:%s1707] %v1826
                %v1828 = vld [vmem:[%s1716 + $0xdc] sm:%s1707]
                %1829 = vst [vmem:[%s1717 + $0xdc] sm:%s1707] %v1828
                %v1830 = vld [vmem:[%s1716 + $0xe0] sm:%s1707]
                %1831 = vst [vmem:[%s1717 + $0xe0] sm:%s1707] %v1830
                %v1832 = vld [vmem:[%s1716 + $0xe4] sm:%s1707]
                %1833 = vst [vmem:[%s1717 + $0xe4] sm:%s1707] %v1832
                %v1834 = vld [vmem:[%s1716 + $0xe8] sm:%s1707]
                %1835 = vst [vmem:[%s1717 + $0xe8] sm:%s1707] %v1834
                %v1836 = vld [vmem:[%s1716 + $0xec] sm:%s1707]
                %1837 = vst [vmem:[%s1717 + $0xec] sm:%s1707] %v1836
                %v1838 = vld [vmem:[%s1716 + $0xf0] sm:%s1707]
                %1839 = vst [vmem:[%s1717 + $0xf0] sm:%s1707] %v1838
                %v1840 = vld [vmem:[%s1716 + $0xf4] sm:%s1707]
                %1841 = vst [vmem:[%s1717 + $0xf4] sm:%s1707] %v1840
                %v1842 = vld [vmem:[%s1716 + $0xf8] sm:%s1707]
                %1843 = vst [vmem:[%s1717 + $0xf8] sm:%s1707] %v1842
                %v1844 = vld [vmem:[%s1716 + $0xfc] sm:%s1707]
                %1845 = vst [vmem:[%s1717 + $0xfc] sm:%s1707] %v1844
                %s1846 = sadd.s32 1, %s1715
                %p1847 = scmp.ge.s32.totalorder %s1846, %s1708
                %s1848 = scalar_select %p1847, 0, %s1846
                %s1849 = smul.u32 %s1848, 256
                %s1850 = smul.u32 %s1848, 256
                %s1851 = scalar_lea.vmem %s1686, %s1849 [#allocation4]
                %s1852 = scalar_lea.vmem %s1698, %s1850
              $region65: #{tpu_custom_call.1} parent=59 // loop_footer
                %s1712 = sadd.s32 %s1710, 1
              $region66: #{tpu_custom_call.1} parent=59 // loop_footer_branch
                %1709 = sbr.rel target = $region62
              $region67: #{tpu_custom_call.1} parent=59 // loop_exit
                _
              %s1853 = sshrl.u32 %s1694, 6
              %s1854 = sand.u32 %s1694, 63
              %s1855 = smul.u32 %s1853, 64
              %s1856 = smul.u32 4, %s1855
              %s1857 = scalar_lea.vmem %s1686, %s1856 [#allocation4]
              %s1858 = smul.u32 4, %s1855
              %s1859 = scalar_lea.vmem %s1698, %s1858
              // While loop
              $region68: #{tpu_custom_call.1} parent=59 // loop_pre_header
                _
              $region69: #{tpu_custom_call.1} parent=59 // loop_header
                %s1861 = sphi 0, %s1863
                %p1862 = scmp.ge.s32.totalorder %s1861, %s1854
                %s1866 = sphi 0, %s1873
                %s1867 = sphi %s1857, %s1876
                %s1868 = sphi %s1859, %s1877
              $region70: #{tpu_custom_call.1} parent=59 // loop_header_branch
                %1865 = sbr.rel (%p1862) target = $region74
              $region71: #{tpu_custom_call.1} parent=59 // loop_body
                %v1869 = vld [vmem:[%s1867] sm:%s1707]
                %1870 = vst [vmem:[%s1868] sm:%s1707] %v1869
                %s1871 = sadd.s32 1, %s1866
                %p1872 = scmp.ge.s32.totalorder %s1871, %s1854
                %s1873 = scalar_select %p1872, 0, %s1871
                %s1874 = smul.u32 %s1873, 4
                %s1875 = smul.u32 %s1873, 4
                %s1876 = scalar_lea.vmem %s1857, %s1874 [#allocation4]
                %s1877 = scalar_lea.vmem %s1859, %s1875
              $region72: #{tpu_custom_call.1} parent=59 // loop_footer
                %s1863 = sadd.s32 %s1861, 1
              $region73: #{tpu_custom_call.1} parent=59 // loop_footer_branch
                %1860 = sbr.rel target = $region69
              $region74: #{tpu_custom_call.1} parent=59 // loop_exit
                _
            $region60: #{tpu_custom_call.1} parent=51 // pred_fallthru
              _
          $region52: #{tpu_custom_call.1} parent=47 // pred_fallthru
            _
          %2052 = vnop
        $region48: #{tpu_custom_call.1} parent=27 // pred_fallthru
          _
      $region28: #{tpu_custom_call.1} parent=5 // pred_fallthru
        _
      %p2053 = scmp.le.s32.totalorder 2, %s8
      // Predicated region
      $region93: #{tpu_custom_call.1} parent=5 // pred_check
        %p2054 = pneg %p2053
      $region94: #{tpu_custom_call.1} parent=5 // pred_check_branch
        %2056 = sbr.rel (%p2054) target = $region96
      $region95: #{tpu_custom_call.1} parent=5 // pred_region
        %s2057 = ssub.s32 %s8, 2
        // Predicated region
        $region97: #{tpu_custom_call.1} parent=95 // pred_check
          %p2058 = pneg %p98
        $region98: #{tpu_custom_call.1} parent=95 // pred_check_branch
          %2060 = sbr.rel (%p2058) target = $region100
        $region99: #{tpu_custom_call.1} parent=95 // pred_region
          %s2061 = sand.u32 %s83, 1
          %s2062 = sand.u32 %s83, 1
          %s2063 = smul.addr %s2062, 256
          %s2064 = scalar_lea.vmem [#allocation4], %s2063
        $region100: #{tpu_custom_call.1} parent=95 // pred_fallthru
          _
      $region96: #{tpu_custom_call.1} parent=5 // pred_fallthru
        _
    $region6: #{tpu_custom_call.1} parent=1 // loop_footer
      %s12 = sadd.s32 1, %s8
    $region7: #{tpu_custom_call.1} parent=1 // loop_footer_branch
      %7 = sbr.rel target = $region3
    $region8: #{tpu_custom_call.1} parent=1 // loop_exit
      _

</llo_original>
